<compile_context>
chip_gen: v6e
topology: v6e:2x2x1
jax: 0.10.0
libtpu: 0.0.40
codegen_flags: <defaults>
</compile_context>

<pallas_src>
import functools

import jax
import jax.numpy as jnp
from jax.experimental import pallas as pl
from jax.experimental.pallas import tpu as pltpu


# -----------------------------------------------------------------------------
# Fused kernel: in-kernel 3x3 conv (9 shifted-slice matmuls) -> ReLU ->
#               GAP accumulation -> [last tile] Linear(+folded BN) -> ReLU
#               -> Linear
# -----------------------------------------------------------------------------
def _fused_kernel(x_ref, cw_ref, w1_ref, b1_ref, w2_ref, b2_ref,
                  out_ref, acc_ref, *, tile_h, width, cin_p, inv_hw):
    # x_ref:   (1, 1, tile_h+2, W+2, Cin_p) bf16  halo-padded row tile, batch b
    # cw_ref:  (9, Cin_p, Cout)             bf16  conv weights, tap-major
    # w1_ref:  (Cout, Hd) f32  Linear1 with BN folded in
    # b1_ref:  (1, Hd)    f32
    # w2_ref:  (Hd, O)    f32  Linear2
    # b2_ref:  (1, O)     f32
    # out_ref: (1, 1, O)  f32  per-batch output row
    # acc_ref: (1, Cout)  f32  GAP accumulator (persists across row tiles)
    t = pl.program_id(1)

    @pl.when(t == 0)
    def _init():
        acc_ref[...] = jnp.zeros_like(acc_ref)

    xt = x_ref[...].reshape(tile_h + 2, width + 2, cin_p)     # bf16
    cw = cw_ref[...]                                          # (9, Cin_p, Cout)

    # 3x3 conv as 9 accumulating shifted-slice matmuls (f32 accumulator).
    conv = None
    for tap in range(9):
        dy, dx = divmod(tap, 3)
        xs = xt[dy:dy + tile_h, dx:dx + width, :]             # (tile_h, W, Cin_p)
        xs = xs.reshape(tile_h * width, cin_p)                # rows lane-dense in Cout after dot
        part = jnp.dot(xs, cw[tap], preferred_element_type=jnp.float32)
        conv = part if conv is None else conv + part
    conv = jnp.maximum(conv, 0.0)                             # ReLU, (tile_h*W, Cout)

    # Partial global-average-pool: accumulate column sums of this row tile.
    acc_ref[...] += jnp.sum(conv, axis=0, keepdims=True)      # (1, Cout)

    # Regressor head only on the last row tile of this batch element.
    @pl.when(t == pl.num_programs(1) - 1)
    def _head():
        feats = acc_ref[...] * inv_hw                         # (1, Cout)
        h = jnp.dot(feats, w1_ref[...],
                    preferred_element_type=jnp.float32) + b1_ref[...]
        h = jnp.maximum(h, 0.0)                               # hidden ReLU
        out = jnp.dot(h, w2_ref[...],
                      preferred_element_type=jnp.float32) + b2_ref[...]
        out_ref[...] = out.reshape(out_ref.shape)


# -----------------------------------------------------------------------------
# Wrapper: layout plumbing (NHWC pad + overlapping row tiles + bf16 cast)
# -----------------------------------------------------------------------------
def _forward_pallas(kparams, x, tile_h=8):
    b, cin, h, w = x.shape
    tile_h = min(tile_h, h)
    assert h % tile_h == 0, "H must be divisible by the row-tile size"
    n_t = h // tile_h

    cw = kparams["conv_w"]                   # (9, Cin_p, Cout) bf16
    cin_p = cw.shape[1]
    cout = cw.shape[2]
    hd = kparams["w1"].shape[1]
    o = kparams["w2"].shape[1]

    # NHWC + 1px spatial halo + channel pad to sublane multiple, then bf16.
    x_nhwc = jnp.transpose(x, (0, 2, 3, 1))
    x_pad = jnp.pad(x_nhwc, ((0, 0), (1, 1), (1, 1), (0, cin_p - cin)))
    # Overlapping row tiles (2 halo rows duplicated per tile — tiny overhead).
    x_tiles = jnp.stack(
        [x_pad[:, i * tile_h:i * tile_h + tile_h + 2] for i in range(n_t)],
        axis=1).astype(jnp.bfloat16)         # (B, n_t, tile_h+2, W+2, Cin_p)

    kernel = functools.partial(
        _fused_kernel, tile_h=tile_h, width=w, cin_p=cin_p,
        inv_hw=1.0 / float(h * w))

    out3 = pl.pallas_call(
        kernel,
        out_shape=jax.ShapeDtypeStruct((b, 1, o), jnp.float32),
        grid=(b, n_t),
        in_specs=[
            pl.BlockSpec((1, 1, tile_h + 2, w + 2, cin_p),
                         lambda bi, ti: (bi, ti, 0, 0, 0)),
            pl.BlockSpec((9, cin_p, cout), lambda bi, ti: (0, 0, 0)),
            pl.BlockSpec((cout, hd), lambda bi, ti: (0, 0)),
            pl.BlockSpec((1, hd), lambda bi, ti: (0, 0)),
            pl.BlockSpec((hd, o), lambda bi, ti: (0, 0)),
            pl.BlockSpec((1, o), lambda bi, ti: (0, 0)),
        ],
        out_specs=pl.BlockSpec((1, 1, o), lambda bi, ti: (bi, 0, 0)),
        scratch_shapes=[pltpu.VMEM((1, cout), jnp.float32)],
        compiler_params=pltpu.CompilerParams(
            dimension_semantics=("parallel", "arbitrary"),
            vmem_limit_bytes=32 * 1024 * 1024),
    )(x_tiles, cw, kparams["w1"], kparams["b1"], kparams["w2"], kparams["b2"])
    return out3.reshape(b, o)


def baseline_distortion_forward(kparams, x, k=None):
    khat = _forward_pallas(kparams, x)
    if k is None:
        return khat
    comp_target = jnp.zeros_like(k)
    comp_hat = jnp.zeros_like(k)
    return khat, comp_hat, comp_target


# -----------------------------------------------------------------------------
# One-time parameter prep (hoisted out of the per-call path):
#   * conv weight: pad Cin -> 8, flatten taps, cast bf16
#   * BatchNorm1d (eval) folded into Linear1
# -----------------------------------------------------------------------------
def prepare_kernel_params(params, eps=1e-5):
    conv_w = params["conv_w"]                       # (3, 3, Cin, Cout) HWIO
    kh, kw, cin, cout = conv_w.shape
    cin_p = max(8, -(-cin // 8) * 8)
    cw = jnp.pad(conv_w, ((0, 0), (0, 0), (0, cin_p - cin), (0, 0)))
    cw = cw.reshape(kh * kw, cin_p, cout).astype(jnp.bfloat16)

    scale = params["bn_gamma"] * jax.lax.rsqrt(params["bn_var"] + eps)
    w1f = (params["w1"] * scale).astype(jnp.float32)
    b1f = ((params["b1"] - params["bn_mean"]) * scale
           + params["bn_beta"]).astype(jnp.float32)
    return {"conv_w": cw, "w1": w1f, "b1": b1f,
            "w2": params["w2"].astype(jnp.float32),
            "b2": params["b2"].astype(jnp.float32)}


# -----------------------------------------------------------------------------
# Pure-JAX reference (un-fused, explicit BN).  Uses the same bf16 quantization
# of x / conv weights as the kernel so the check can be tight.
# -----------------------------------------------------------------------------
def _reference_forward(params, x, eps=1e-5):
    hi = jax.lax.Precision.HIGHEST
    b, cin, h, w = x.shape
    cw = params["conv_w"].astype(jnp.bfloat16).astype(jnp.float32)
    x_nhwc = jnp.transpose(x, (0, 2, 3, 1)).astype(jnp.bfloat16).astype(jnp.float32)
    x_pad = jnp.pad(x_nhwc, ((0, 0), (1, 1), (1, 1), (0, 0)))
    conv = jnp.zeros((b, h, w, cw.shape[-1]), jnp.float32)
    for dy in range(3):
        for dx in range(3):
            conv = conv + jnp.einsum(
                "bhwc,co->bhwo", x_pad[:, dy:dy + h, dx:dx + w, :], cw[dy, dx],
                precision=hi)
    conv = jnp.maximum(conv, 0.0)
    feats = conv.mean(axis=(1, 2))                              # (B, Cout) GAP
    hid = jnp.dot(feats, params["w1"], precision=hi) + params["b1"]
    inv_std = jax.lax.rsqrt(params["bn_var"] + eps)
    hid = (hid - params["bn_mean"]) * inv_std * params["bn_gamma"] \
        + params["bn_beta"]
    hid = jnp.maximum(hid, 0.0)
    return jnp.dot(hid, params["w2"], precision=hi) + params["b2"]


def init_params(key, cin, num_features, num_hidden, num_outputs):
    k0, k1, k2, k3, k4, k5, k6, k7 = jax.random.split(key, 8)
    return {
        # extractor stand-in conv: HWIO
        "conv_w": 0.05 * jax.random.normal(
            k0, (3, 3, cin, num_features), jnp.float32),
        # Linear(num_features, num_hidden)
        "w1": (jax.random.normal(k1, (num_features, num_hidden), jnp.float32)
               / jnp.sqrt(jnp.float32(num_features))),
        "b1": 0.01 * jax.random.normal(k2, (1, num_hidden), jnp.float32),
        # BatchNorm1d(num_hidden) — non-trivial running stats to exercise fold
        "bn_gamma": 1.0 + 0.1 * jax.random.normal(k3, (1, num_hidden),
                                                  jnp.float32),
        "bn_beta": 0.1 * jax.random.normal(k4, (1, num_hidden), jnp.float32),
        "bn_mean": 0.1 * jax.random.normal(k5, (1, num_hidden), jnp.float32),
        "bn_var": 0.5 + jax.random.uniform(k6, (1, num_hidden), jnp.float32),
        # Linear(num_hidden, num_outputs)
        "w2": (jax.random.normal(k7, (num_hidden, num_outputs), jnp.float32)
               / jnp.sqrt(jnp.float32(num_hidden))),
        "b2": jnp.zeros((1, num_outputs), jnp.float32),
    }


if __name__ == "__main__":
    B, CIN, H, W = 2, 3, 16, 16
    NUM_FEATURES, NUM_HIDDEN, NUM_OUTPUTS = 128, 128, 4

    key = jax.random.PRNGKey(0)
    kx, kk, kp = jax.random.split(key, 3)
    x = jax.random.normal(kx, (B, CIN, H, W), jnp.float32)   # NCHW like PyTorch
    k = jax.random.normal(kk, (B, NUM_OUTPUTS), jnp.float32)
    params = init_params(kp, CIN, NUM_FEATURES, NUM_HIDDEN, NUM_OUTPUTS)

    # Constant prep hoisted out of the per-call path (done once).
    kparams = prepare_kernel_params(params)
    fwd = jax.jit(functools.partial(baseline_distortion_forward, kparams))

    # k is None branch
    khat = jax.block_until_ready(fwd(x))
    assert khat.shape == (B, NUM_OUTPUTS)
    assert bool(jnp.all(jnp.isfinite(khat)))

    # correctness check against the un-fused explicit-BN reference (validates
    # the in-kernel conv tiling, GAP accumulation, BN fold and head)
    ref = jax.block_until_ready(_reference_forward(params, x))
    assert bool(jnp.allclose(khat, ref, rtol=2e-3, atol=2e-3)), (
        "pallas/reference mismatch: max abs diff = "
        f"{float(jnp.max(jnp.abs(khat - ref)))}")

    # k provided branch
    khat2, comp_hat, comp_target = jax.block_until_ready(
        baseline_distortion_forward(kparams, x, k))
    assert khat2.shape == (B, NUM_OUTPUTS)
    assert comp_hat.shape == k.shape and comp_target.shape == k.shape
    assert bool(jnp.all(comp_hat == 0)) and bool(jnp.all(comp_target == 0))

    print("KERNEL_OK")
</pallas_src>

<mosaic_0001>
module attributes {stable_mosaic.version = 11 : i64} {
  func.func @_fused_kernel(%arg0: i32, %arg1: i32, %arg2: memref<1x1x10x18x8xbf16, #tpu.memory_space<vmem>>, %arg3: memref<9x8x128xbf16, #tpu.memory_space<vmem>>, %arg4: memref<128x128xf32, #tpu.memory_space<vmem>>, %arg5: memref<1x128xf32, #tpu.memory_space<vmem>>, %arg6: memref<128x4xf32, #tpu.memory_space<vmem>>, %arg7: memref<1x4xf32, #tpu.memory_space<vmem>>, %arg8: memref<1x1x4xf32, #tpu.memory_space<vmem>>, %arg9: memref<1x128xf32, #tpu.memory_space<vmem>>) attributes {dimension_semantics = [#tpu.dimension_semantics<parallel>, #tpu.dimension_semantics<arbitrary>], iteration_bounds = array<i64: 2, 2>, scalar_prefetch = 0 : i64, scratch_operands = 1 : i64, tpu.core_type = #tpu.core_type<tc>, window_params = [{transform_indices = @transform_0, window_bounds = array<i64: 1, 1, 10, 18, 8>}, {pipeline_mode = #tpu.pipeline_mode<synchronous>, transform_indices = @transform_1, window_bounds = array<i64: 9, 8, 128>}, {pipeline_mode = #tpu.pipeline_mode<synchronous>, transform_indices = @transform_2, window_bounds = array<i64: 128, 128>}, {pipeline_mode = #tpu.pipeline_mode<synchronous>, transform_indices = @transform_3, window_bounds = array<i64: 1, 128>}, {pipeline_mode = #tpu.pipeline_mode<synchronous>, transform_indices = @transform_4, window_bounds = array<i64: 128, 4>}, {pipeline_mode = #tpu.pipeline_mode<synchronous>, transform_indices = @transform_5, window_bounds = array<i64: 1, 4>}, {transform_indices = @transform_6, window_bounds = array<i64: 1, 1, 4>}]} {
    %c0_i32 = arith.constant 0 : i32
    %0 = arith.cmpi eq, %arg1, %c0_i32 : i32
    %1 = arith.extui %0 : i1 to i32
    %c0_i32_0 = arith.constant 0 : i32
    %2 = arith.cmpi ne, %1, %c0_i32_0 : i32
    scf.if %2 {
      %cst_23 = arith.constant 0.000000e+00 : f32
      %69 = vector.broadcast %cst_23 : f32 to vector<1x128xf32>
      %c0_24 = arith.constant 0 : index
      %c0_25 = arith.constant 0 : index
      %70 = vector.load %arg9[%c0_24, %c0_25] : memref<1x128xf32, #tpu.memory_space<vmem>>, vector<1x128xf32>
      tpu.vector_store %arg9[%c0_24, %c0_25], %69 {strides = array<i32>} : memref<1x128xf32, #tpu.memory_space<vmem>>, vector<1x128xf32>,
    } else {
    }
    %c0 = arith.constant 0 : index
    %c0_1 = arith.constant 0 : index
    %c0_2 = arith.constant 0 : index
    %c0_3 = arith.constant 0 : index
    %c0_4 = arith.constant 0 : index
    %3 = vector.load %arg2[%c0, %c0_1, %c0_2, %c0_3, %c0_4] : memref<1x1x10x18x8xbf16, #tpu.memory_space<vmem>>, vector<1x1x10x18x8xbf16>
    %4 = vector.shape_cast %3 : vector<1x1x10x18x8xbf16> to vector<10x18x8xbf16>
    %c0_5 = arith.constant 0 : index
    %c0_6 = arith.constant 0 : index
    %c0_7 = arith.constant 0 : index
    %5 = vector.load %arg3[%c0_5, %c0_6, %c0_7] : memref<9x8x128xbf16, #tpu.memory_space<vmem>>, vector<9x8x128xbf16>
    %6 = vector.extract_strided_slice %4 {offsets = [0, 0, 0], sizes = [8, 16, 8], strides = [1, 1, 1]} : vector<10x18x8xbf16> to vector<8x16x8xbf16>
    %7 = vector.shape_cast %6 : vector<8x16x8xbf16> to vector<128x8xbf16>
    %8 = vector.extract_strided_slice %5 {offsets = [0, 0, 0], sizes = [1, 8, 128], strides = [1, 1, 1]} : vector<9x8x128xbf16> to vector<1x8x128xbf16>
    %9 = vector.shape_cast %8 : vector<1x8x128xbf16> to vector<8x128xbf16>
    %cst = arith.constant dense<0.000000e+00> : vector<128x128xf32>
    %10 = tpu.matmul %7, %9, %cst {dimension_numbers = #tpu.dot_dimension_numbers<[1], [0], [0], [1], [0, 0, 1, 1], [], []>} : vector<128x8xbf16>, vector<8x128xbf16>, vector<128x128xf32> -> vector<128x128xf32>
    %11 = vector.extract_strided_slice %4 {offsets = [0, 1, 0], sizes = [8, 16, 8], strides = [1, 1, 1]} : vector<10x18x8xbf16> to vector<8x16x8xbf16>
    %12 = vector.shape_cast %11 : vector<8x16x8xbf16> to vector<128x8xbf16>
    %13 = vector.extract_strided_slice %5 {offsets = [1, 0, 0], sizes = [1, 8, 128], strides = [1, 1, 1]} : vector<9x8x128xbf16> to vector<1x8x128xbf16>
    %14 = vector.shape_cast %13 : vector<1x8x128xbf16> to vector<8x128xbf16>
    %cst_8 = arith.constant dense<0.000000e+00> : vector<128x128xf32>
    %15 = tpu.matmul %12, %14, %cst_8 {dimension_numbers = #tpu.dot_dimension_numbers<[1], [0], [0], [1], [0, 0, 1, 1], [], []>} : vector<128x8xbf16>, vector<8x128xbf16>, vector<128x128xf32> -> vector<128x128xf32>
    %16 = arith.addf %10, %15 : vector<128x128xf32>
    %17 = vector.extract_strided_slice %4 {offsets = [0, 2, 0], sizes = [8, 16, 8], strides = [1, 1, 1]} : vector<10x18x8xbf16> to vector<8x16x8xbf16>
    %18 = vector.shape_cast %17 : vector<8x16x8xbf16> to vector<128x8xbf16>
    %19 = vector.extract_strided_slice %5 {offsets = [2, 0, 0], sizes = [1, 8, 128], strides = [1, 1, 1]} : vector<9x8x128xbf16> to vector<1x8x128xbf16>
    %20 = vector.shape_cast %19 : vector<1x8x128xbf16> to vector<8x128xbf16>
    %cst_9 = arith.constant dense<0.000000e+00> : vector<128x128xf32>
    %21 = tpu.matmul %18, %20, %cst_9 {dimension_numbers = #tpu.dot_dimension_numbers<[1], [0], [0], [1], [0, 0, 1, 1], [], []>} : vector<128x8xbf16>, vector<8x128xbf16>, vector<128x128xf32> -> vector<128x128xf32>
    %22 = arith.addf %16, %21 : vector<128x128xf32>
    %23 = vector.extract_strided_slice %4 {offsets = [1, 0, 0], sizes = [8, 16, 8], strides = [1, 1, 1]} : vector<10x18x8xbf16> to vector<8x16x8xbf16>
    %24 = vector.shape_cast %23 : vector<8x16x8xbf16> to vector<128x8xbf16>
    %25 = vector.extract_strided_slice %5 {offsets = [3, 0, 0], sizes = [1, 8, 128], strides = [1, 1, 1]} : vector<9x8x128xbf16> to vector<1x8x128xbf16>
    %26 = vector.shape_cast %25 : vector<1x8x128xbf16> to vector<8x128xbf16>
    %cst_10 = arith.constant dense<0.000000e+00> : vector<128x128xf32>
    %27 = tpu.matmul %24, %26, %cst_10 {dimension_numbers = #tpu.dot_dimension_numbers<[1], [0], [0], [1], [0, 0, 1, 1], [], []>} : vector<128x8xbf16>, vector<8x128xbf16>, vector<128x128xf32> -> vector<128x128xf32>
    %28 = arith.addf %22, %27 : vector<128x128xf32>
    %29 = vector.extract_strided_slice %4 {offsets = [1, 1, 0], sizes = [8, 16, 8], strides = [1, 1, 1]} : vector<10x18x8xbf16> to vector<8x16x8xbf16>
    %30 = vector.shape_cast %29 : vector<8x16x8xbf16> to vector<128x8xbf16>
    %31 = vector.extract_strided_slice %5 {offsets = [4, 0, 0], sizes = [1, 8, 128], strides = [1, 1, 1]} : vector<9x8x128xbf16> to vector<1x8x128xbf16>
    %32 = vector.shape_cast %31 : vector<1x8x128xbf16> to vector<8x128xbf16>
    %cst_11 = arith.constant dense<0.000000e+00> : vector<128x128xf32>
    %33 = tpu.matmul %30, %32, %cst_11 {dimension_numbers = #tpu.dot_dimension_numbers<[1], [0], [0], [1], [0, 0, 1, 1], [], []>} : vector<128x8xbf16>, vector<8x128xbf16>, vector<128x128xf32> -> vector<128x128xf32>
    %34 = arith.addf %28, %33 : vector<128x128xf32>
    %35 = vector.extract_strided_slice %4 {offsets = [1, 2, 0], sizes = [8, 16, 8], strides = [1, 1, 1]} : vector<10x18x8xbf16> to vector<8x16x8xbf16>
    %36 = vector.shape_cast %35 : vector<8x16x8xbf16> to vector<128x8xbf16>
    %37 = vector.extract_strided_slice %5 {offsets = [5, 0, 0], sizes = [1, 8, 128], strides = [1, 1, 1]} : vector<9x8x128xbf16> to vector<1x8x128xbf16>
    %38 = vector.shape_cast %37 : vector<1x8x128xbf16> to vector<8x128xbf16>
    %cst_12 = arith.constant dense<0.000000e+00> : vector<128x128xf32>
    %39 = tpu.matmul %36, %38, %cst_12 {dimension_numbers = #tpu.dot_dimension_numbers<[1], [0], [0], [1], [0, 0, 1, 1], [], []>} : vector<128x8xbf16>, vector<8x128xbf16>, vector<128x128xf32> -> vector<128x128xf32>
    %40 = arith.addf %34, %39 : vector<128x128xf32>
    %41 = vector.extract_strided_slice %4 {offsets = [2, 0, 0], sizes = [8, 16, 8], strides = [1, 1, 1]} : vector<10x18x8xbf16> to vector<8x16x8xbf16>
    %42 = vector.shape_cast %41 : vector<8x16x8xbf16> to vector<128x8xbf16>
    %43 = vector.extract_strided_slice %5 {offsets = [6, 0, 0], sizes = [1, 8, 128], strides = [1, 1, 1]} : vector<9x8x128xbf16> to vector<1x8x128xbf16>
    %44 = vector.shape_cast %43 : vector<1x8x128xbf16> to vector<8x128xbf16>
    %cst_13 = arith.constant dense<0.000000e+00> : vector<128x128xf32>
    %45 = tpu.matmul %42, %44, %cst_13 {dimension_numbers = #tpu.dot_dimension_numbers<[1], [0], [0], [1], [0, 0, 1, 1], [], []>} : vector<128x8xbf16>, vector<8x128xbf16>, vector<128x128xf32> -> vector<128x128xf32>
    %46 = arith.addf %40, %45 : vector<128x128xf32>
    %47 = vector.extract_strided_slice %4 {offsets = [2, 1, 0], sizes = [8, 16, 8], strides = [1, 1, 1]} : vector<10x18x8xbf16> to vector<8x16x8xbf16>
    %48 = vector.shape_cast %47 : vector<8x16x8xbf16> to vector<128x8xbf16>
    %49 = vector.extract_strided_slice %5 {offsets = [7, 0, 0], sizes = [1, 8, 128], strides = [1, 1, 1]} : vector<9x8x128xbf16> to vector<1x8x128xbf16>
    %50 = vector.shape_cast %49 : vector<1x8x128xbf16> to vector<8x128xbf16>
    %cst_14 = arith.constant dense<0.000000e+00> : vector<128x128xf32>
    %51 = tpu.matmul %48, %50, %cst_14 {dimension_numbers = #tpu.dot_dimension_numbers<[1], [0], [0], [1], [0, 0, 1, 1], [], []>} : vector<128x8xbf16>, vector<8x128xbf16>, vector<128x128xf32> -> vector<128x128xf32>
    %52 = arith.addf %46, %51 : vector<128x128xf32>
    %53 = vector.extract_strided_slice %4 {offsets = [2, 2, 0], sizes = [8, 16, 8], strides = [1, 1, 1]} : vector<10x18x8xbf16> to vector<8x16x8xbf16>
    %54 = vector.shape_cast %53 : vector<8x16x8xbf16> to vector<128x8xbf16>
    %55 = vector.extract_strided_slice %5 {offsets = [8, 0, 0], sizes = [1, 8, 128], strides = [1, 1, 1]} : vector<9x8x128xbf16> to vector<1x8x128xbf16>
    %56 = vector.shape_cast %55 : vector<1x8x128xbf16> to vector<8x128xbf16>
    %cst_15 = arith.constant dense<0.000000e+00> : vector<128x128xf32>
    %57 = tpu.matmul %54, %56, %cst_15 {dimension_numbers = #tpu.dot_dimension_numbers<[1], [0], [0], [1], [0, 0, 1, 1], [], []>} : vector<128x8xbf16>, vector<8x128xbf16>, vector<128x128xf32> -> vector<128x128xf32>
    %58 = arith.addf %52, %57 : vector<128x128xf32>
    %cst_16 = arith.constant 0.000000e+00 : f32
    %59 = vector.broadcast %cst_16 : f32 to vector<128x128xf32>
    %60 = arith.maximumf %58, %59 : vector<128x128xf32>
    %c0_17 = arith.constant 0 : index
    %c0_18 = arith.constant 0 : index
    %61 = vector.load %arg9[%c0_17, %c0_18] : memref<1x128xf32, #tpu.memory_space<vmem>>, vector<1x128xf32>
    %cst_19 = arith.constant dense<0.000000e+00> : vector<128xf32>
    %62 = vector.multi_reduction <add>, %60, %cst_19 [0] : vector<128x128xf32> to vector<128xf32>
    %63 = vector.shape_cast %62 : vector<128xf32> to vector<1x128xf32>
    %64 = arith.addf %61, %63 : vector<1x128xf32>
    %c0_20 = arith.constant 0 : index
    %c0_21 = arith.constant 0 : index
    %65 = vector.load %arg9[%c0_20, %c0_21] : memref<1x128xf32, #tpu.memory_space<vmem>>, vector<1x128xf32>
    tpu.vector_store %arg9[%c0_20, %c0_21], %64 {strides = array<i32>} : memref<1x128xf32, #tpu.memory_space<vmem>>, vector<1x128xf32>,
    %c1_i32 = arith.constant 1 : i32
    %66 = arith.cmpi eq, %arg1, %c1_i32 : i32
    %67 = arith.extui %66 : i1 to i32
    %c0_i32_22 = arith.constant 0 : i32
    %68 = arith.cmpi ne, %67, %c0_i32_22 : i32
    scf.if %68 {
      %c0_23 = arith.constant 0 : index
      %c0_24 = arith.constant 0 : index
      %69 = vector.load %arg9[%c0_23, %c0_24] : memref<1x128xf32, #tpu.memory_space<vmem>>, vector<1x128xf32>
      %cst_25 = arith.constant 3.906250e-03 : f32
      %70 = vector.broadcast %cst_25 : f32 to vector<1x128xf32>
      %71 = arith.mulf %69, %70 : vector<1x128xf32>
      %c0_26 = arith.constant 0 : index
      %c0_27 = arith.constant 0 : index
      %72 = vector.load %arg4[%c0_26, %c0_27] : memref<128x128xf32, #tpu.memory_space<vmem>>, vector<128x128xf32>
      %cst_28 = arith.constant dense<0.000000e+00> : vector<1x128xf32>
      %73 = tpu.matmul %71, %72, %cst_28 {dimension_numbers = #tpu.dot_dimension_numbers<[1], [0], [0], [1], [0, 0, 1, 1], [], []>} : vector<1x128xf32>, vector<128x128xf32>, vector<1x128xf32> -> vector<1x128xf32>
      %c0_29 = arith.constant 0 : index
      %c0_30 = arith.constant 0 : index
      %74 = vector.load %arg5[%c0_29, %c0_30] : memref<1x128xf32, #tpu.memory_space<vmem>>, vector<1x128xf32>
      %75 = arith.addf %73, %74 : vector<1x128xf32>
      %cst_31 = arith.constant 0.000000e+00 : f32
      %76 = vector.broadcast %cst_31 : f32 to vector<1x128xf32>
      %77 = arith.maximumf %75, %76 : vector<1x128xf32>
      %c0_32 = arith.constant 0 : index
      %c0_33 = arith.constant 0 : index
      %78 = vector.load %arg6[%c0_32, %c0_33] : memref<128x4xf32, #tpu.memory_space<vmem>>, vector<128x4xf32>
      %cst_34 = arith.constant dense<0.000000e+00> : vector<1x4xf32>
      %79 = tpu.matmul %77, %78, %cst_34 {dimension_numbers = #tpu.dot_dimension_numbers<[1], [0], [0], [1], [0, 0, 1, 1], [], []>} : vector<1x128xf32>, vector<128x4xf32>, vector<1x4xf32> -> vector<1x4xf32>
      %c0_35 = arith.constant 0 : index
      %c0_36 = arith.constant 0 : index
      %80 = vector.load %arg7[%c0_35, %c0_36] : memref<1x4xf32, #tpu.memory_space<vmem>>, vector<1x4xf32>
      %81 = arith.addf %79, %80 : vector<1x4xf32>
      %82 = vector.shape_cast %81 : vector<1x4xf32> to vector<1x1x4xf32>
      %c0_37 = arith.constant 0 : index
      %c0_38 = arith.constant 0 : index
      %c0_39 = arith.constant 0 : index
      %83 = vector.load %arg8[%c0_37, %c0_38, %c0_39] : memref<1x1x4xf32, #tpu.memory_space<vmem>>, vector<1x1x4xf32>
      tpu.vector_store %arg8[%c0_37, %c0_38, %c0_39], %82 {strides = array<i32>} : memref<1x1x4xf32, #tpu.memory_space<vmem>>, vector<1x1x4xf32>,
    } else {
    }
    return
  }
  func.func @transform_0(%arg0: i32, %arg1: i32) -> (i32, i32, i32, i32, i32) {
    %c0_i32 = arith.constant 0 : i32
    %c0_i32_0 = arith.constant 0 : i32
    %c0_i32_1 = arith.constant 0 : i32
    %c0_i32_2 = arith.constant 0 : i32
    return %arg0, %arg1, %c0_i32, %c0_i32_0, %c0_i32_1 : i32, i32, i32, i32, i32
  }
  func.func @transform_1(%arg0: i32, %arg1: i32) -> (i32, i32, i32) {
    %c0_i32 = arith.constant 0 : i32
    %c0_i32_0 = arith.constant 0 : i32
    %c0_i32_1 = arith.constant 0 : i32
    %c0_i32_2 = arith.constant 0 : i32
    return %c0_i32, %c0_i32_0, %c0_i32_1 : i32, i32, i32
  }
  func.func @transform_2(%arg0: i32, %arg1: i32) -> (i32, i32) {
    %c0_i32 = arith.constant 0 : i32
    %c0_i32_0 = arith.constant 0 : i32
    %c0_i32_1 = arith.constant 0 : i32
    return %c0_i32, %c0_i32_0 : i32, i32
  }
  func.func @transform_3(%arg0: i32, %arg1: i32) -> (i32, i32) {
    %c0_i32 = arith.constant 0 : i32
    %c0_i32_0 = arith.constant 0 : i32
    %c0_i32_1 = arith.constant 0 : i32
    return %c0_i32, %c0_i32_0 : i32, i32
  }
  func.func @transform_4(%arg0: i32, %arg1: i32) -> (i32, i32) {
    %c0_i32 = arith.constant 0 : i32
    %c0_i32_0 = arith.constant 0 : i32
    %c0_i32_1 = arith.constant 0 : i32
    return %c0_i32, %c0_i32_0 : i32, i32
  }
  func.func @transform_5(%arg0: i32, %arg1: i32) -> (i32, i32) {
    %c0_i32 = arith.constant 0 : i32
    %c0_i32_0 = arith.constant 0 : i32
    %c0_i32_1 = arith.constant 0 : i32
    return %c0_i32, %c0_i32_0 : i32, i32
  }
  func.func @transform_6(%arg0: i32, %arg1: i32) -> (i32, i32, i32) {
    %c0_i32 = arith.constant 0 : i32
    %c0_i32_0 = arith.constant 0 : i32
    %c0_i32_1 = arith.constant 0 : i32
    return %arg0, %c0_i32, %c0_i32_0 : i32, i32, i32
  }
}

</mosaic_0001>

<llo_original>
// kernel: baseline_distortion_forward.1
$region0: #{baseline_distortion_forward.1}
  #allocation0 [shape = 'u32[]', space=smem, size = 0x4, offset = 0x4, fixed_abs, tag = 'smem constant byte address 0x4 - core index']
  #allocation1 [shape = 'u32[144,128]{1,0:T(1,128)}', space=vmem, size = 0x12000, scoped, tag = 'internal scratch']
  #allocation2 [shape = 'f32[1,128]{1,0:T(1,128)}', space=vmem, size = 0x200, scoped, tag = 'scratch operand']
  %s0 = inlined_call_operand.vmem [shape: bf16[2,2,10,18,8], index: 0, kind: input, shape index: {}]
  %s1 = inlined_call_operand.vmem [shape: bf16[9,8,128], index: 1, kind: input, shape index: {}]
  %s2 = inlined_call_operand.vmem [shape: f32[128,128], index: 2, kind: input, shape index: {}]
  %s3 = inlined_call_operand.vmem [shape: f32[1,128], index: 3, kind: input, shape index: {}]
  %s4 = inlined_call_operand.vmem [shape: f32[128,4], index: 4, kind: input, shape index: {}]
  %s5 = inlined_call_operand.vmem [shape: f32[1,4], index: 5, kind: input, shape index: {}]
  %s6 = inlined_call_operand.hbm [shape: f32[2,1,4], index: 6, kind: output, shape index: {}]
  %s7 = sld [smem:[#allocation0]]
  $region65: #{baseline_distortion_forward.1} parent=0
    _
  %s9 = ssub.s32 1, %s7
  %s10 = scalar_select 0, %s9, %s7
  $region1: #{baseline_distortion_forward.1} parent=0
    #allocation3 [shape = 'u8[1024]{0}', space=vmem, size = 0x400, scoped, tag = 'output window, operand 0']
    #allocation4 [shape = 's32[2]{0}', space=sflag, size = 0x8, scoped, tag = 'scoped memory for baseline_distortion_forward.1']
    %11 = vsyncpa [#allocation4], 0
    %s12 = scalar_lea.sflag [#allocation4], 1
    %13 = vsyncpa %s12, 0
    loop: start=0, step=1, limit=6
    $region2: #{baseline_distortion_forward.1} parent=1 // loop_pre_header
      _
    $region3: #{baseline_distortion_forward.1} parent=1 // loop_header
      %s15 = sphi 0, %s19
      %p16 = scmp.ge.s32.totalorder %s15, 6
      %s22 = sphi 0, %s34
      %s23 = sphi 0, %s30
      %s24 = sphi 0, %s22
      %s25 = sphi 0, %s23
      %s26 = sphi 0, %s24
      %s27 = sphi 0, %s25
      %s39 = sphi 0, %s41
      %s42 = sphi 0, %s39
      %s43 = sphi 0, %s42
      %s59 = sphi 0, %s43
      %s63 = sphi 0, %s63
      %s65 = sphi 0, %s63
      %s66 = sphi 0, %s65
      %s80 = sphi 0, %s66
      %s84 = sphi 0, %s84
      %s86 = sphi 0, %s84
      %s87 = sphi 0, %s86
      %s101 = sphi 0, %s87
      %s105 = sphi 0, %s105
      %s107 = sphi 0, %s105
      %s108 = sphi 0, %s107
      %s122 = sphi 0, %s108
      %s126 = sphi 0, %s126
      %s128 = sphi 0, %s126
      %s129 = sphi 0, %s128
      %s143 = sphi 0, %s129
      %s147 = sphi 0, %s147
      %s149 = sphi 0, %s147
      %s150 = sphi 0, %s149
      %s164 = sphi 0, %s150
      %s170 = sphi 0, %s172
      %s173 = sphi 0, %s170
      %s174 = sphi 0, %s173
      %s190 = sphi 0, %s174
    $region4: #{baseline_distortion_forward.1} parent=1 // loop_header_branch
      %18 = sbr.rel (%p16) target = $region8
    $region5: #{baseline_distortion_forward.1} parent=1 // loop_body
      %s20 = ssub.s32 %s15, 1
      %s21 = ssub.s32 %s15, 2
      %s28 = sadd.s32 1, %s23
      %p29 = scmp.ge.s32.totalorder %s28, 2
      %s30 = scalar_select %p29, 0, %s28
      %s31 = sadd.s32 1, %s22
      %s32 = scalar_select %p29, %s31, %s22
      %p33 = scmp.ge.s32.totalorder %s32, 2
      %s34 = scalar_select %p33, 0, %s32
      %s35 = ssub.s32 %s22, %s34
      %s36 = ssub.s32 %s23, %s30
      %s37 = sor.u32 %s35, %s36
      %p38 = scmp.eq.s32.totalorder %s37, 0
      %s40 = sadd.s32 %s39, 1
      %s41 = scalar_select %p38, %s39, %s40
      %p44 = pneg %p38
      %p45 = scmp.eq.s32.totalorder %s15, 3
      %p46 = por %p44, %p45
      %p47 = scmp.ne.s32.totalorder %s39, %s42
      %p48 = scmp.eq.s32.totalorder %s15, 0
      %p49 = por %p47, %p48
      %p50 = scmp.ne.s32.totalorder %s39, %s42
      %p51 = scmp.eq.s32.totalorder %s20, 3
      %p52 = por %p50, %p51
      %p53 = scmp.ne.s32.totalorder %s42, %s43
      %p54 = scmp.eq.s32.totalorder %s20, 0
      %p55 = por %p53, %p54
      %p56 = scmp.ne.s32.totalorder %s42, %s43
      %p57 = scmp.eq.s32.totalorder %s21, 3
      %p58 = por %p56, %p57
      %p60 = scmp.ne.s32.totalorder %s43, %s59
      %p61 = scmp.eq.s32.totalorder %s21, 0
      %p62 = por %p60, %p61
      %s64 = sadd.s32 %s63, 1
      %p67 = scmp.eq.s32.totalorder %s15, 3
      %p68 = scmp.ne.s32.totalorder %s63, %s65
      %p69 = scmp.eq.s32.totalorder %s15, 0
      %p70 = por %p68, %p69
      %p71 = scmp.ne.s32.totalorder %s63, %s65
      %p72 = scmp.eq.s32.totalorder %s20, 3
      %p73 = por %p71, %p72
      %p74 = scmp.ne.s32.totalorder %s65, %s66
      %p75 = scmp.eq.s32.totalorder %s20, 0
      %p76 = por %p74, %p75
      %p77 = scmp.ne.s32.totalorder %s65, %s66
      %p78 = scmp.eq.s32.totalorder %s21, 3
      %p79 = por %p77, %p78
      %p81 = scmp.ne.s32.totalorder %s66, %s80
      %p82 = scmp.eq.s32.totalorder %s21, 0
      %p83 = por %p81, %p82
      %s85 = sadd.s32 %s84, 1
      %p88 = scmp.eq.s32.totalorder %s15, 3
      %p89 = scmp.ne.s32.totalorder %s84, %s86
      %p90 = scmp.eq.s32.totalorder %s15, 0
      %p91 = por %p89, %p90
      %p92 = scmp.ne.s32.totalorder %s84, %s86
      %p93 = scmp.eq.s32.totalorder %s20, 3
      %p94 = por %p92, %p93
      %p95 = scmp.ne.s32.totalorder %s86, %s87
      %p96 = scmp.eq.s32.totalorder %s20, 0
      %p97 = por %p95, %p96
      %p98 = scmp.ne.s32.totalorder %s86, %s87
      %p99 = scmp.eq.s32.totalorder %s21, 3
      %p100 = por %p98, %p99
      %p102 = scmp.ne.s32.totalorder %s87, %s101
      %p103 = scmp.eq.s32.totalorder %s21, 0
      %p104 = por %p102, %p103
      %s106 = sadd.s32 %s105, 1
      %p109 = scmp.eq.s32.totalorder %s15, 3
      %p110 = scmp.ne.s32.totalorder %s105, %s107
      %p111 = scmp.eq.s32.totalorder %s15, 0
      %p112 = por %p110, %p111
      %p113 = scmp.ne.s32.totalorder %s105, %s107
      %p114 = scmp.eq.s32.totalorder %s20, 3
      %p115 = por %p113, %p114
      %p116 = scmp.ne.s32.totalorder %s107, %s108
      %p117 = scmp.eq.s32.totalorder %s20, 0
      %p118 = por %p116, %p117
      %p119 = scmp.ne.s32.totalorder %s107, %s108
      %p120 = scmp.eq.s32.totalorder %s21, 3
      %p121 = por %p119, %p120
      %p123 = scmp.ne.s32.totalorder %s108, %s122
      %p124 = scmp.eq.s32.totalorder %s21, 0
      %p125 = por %p123, %p124
      %s127 = sadd.s32 %s126, 1
      %p130 = scmp.eq.s32.totalorder %s15, 3
      %p131 = scmp.ne.s32.totalorder %s126, %s128
      %p132 = scmp.eq.s32.totalorder %s15, 0
      %p133 = por %p131, %p132
      %p134 = scmp.ne.s32.totalorder %s126, %s128
      %p135 = scmp.eq.s32.totalorder %s20, 3
      %p136 = por %p134, %p135
      %p137 = scmp.ne.s32.totalorder %s128, %s129
      %p138 = scmp.eq.s32.totalorder %s20, 0
      %p139 = por %p137, %p138
      %p140 = scmp.ne.s32.totalorder %s128, %s129
      %p141 = scmp.eq.s32.totalorder %s21, 3
      %p142 = por %p140, %p141
      %p144 = scmp.ne.s32.totalorder %s129, %s143
      %p145 = scmp.eq.s32.totalorder %s21, 0
      %p146 = por %p144, %p145
      %s148 = sadd.s32 %s147, 1
      %p151 = scmp.eq.s32.totalorder %s15, 3
      %p152 = scmp.ne.s32.totalorder %s147, %s149
      %p153 = scmp.eq.s32.totalorder %s15, 0
      %p154 = por %p152, %p153
      %p155 = scmp.ne.s32.totalorder %s147, %s149
      %p156 = scmp.eq.s32.totalorder %s20, 3
      %p157 = por %p155, %p156
      %p158 = scmp.ne.s32.totalorder %s149, %s150
      %p159 = scmp.eq.s32.totalorder %s20, 0
      %p160 = por %p158, %p159
      %p161 = scmp.ne.s32.totalorder %s149, %s150
      %p162 = scmp.eq.s32.totalorder %s21, 3
      %p163 = por %p161, %p162
      %p165 = scmp.ne.s32.totalorder %s150, %s164
      %p166 = scmp.eq.s32.totalorder %s21, 0
      %p167 = por %p165, %p166
      %s168 = ssub.s32 %s22, %s34
      %p169 = scmp.eq.s32.totalorder %s168, 0
      %s171 = sadd.s32 %s170, 1
      %s172 = scalar_select %p169, %s170, %s171
      %p175 = pneg %p169
      %p176 = scmp.eq.s32.totalorder %s15, 3
      %p177 = por %p175, %p176
      %p178 = scmp.ne.s32.totalorder %s170, %s173
      %p179 = scmp.eq.s32.totalorder %s15, 0
      %p180 = por %p178, %p179
      %p181 = scmp.ne.s32.totalorder %s170, %s173
      %p182 = scmp.eq.s32.totalorder %s20, 3
      %p183 = por %p181, %p182
      %p184 = scmp.ne.s32.totalorder %s173, %s174
      %p185 = scmp.eq.s32.totalorder %s20, 0
      %p186 = por %p184, %p185
      %p187 = scmp.ne.s32.totalorder %s173, %s174
      %p188 = scmp.eq.s32.totalorder %s21, 3
      %p189 = por %p187, %p188
      %p191 = scmp.ne.s32.totalorder %s174, %s190
      %p192 = scmp.eq.s32.totalorder %s21, 0
      %p193 = por %p191, %p192
      %p194 = scmp.le.s32.totalorder 1, %s15
      %p195 = scmp.lt.s32.totalorder %s15, 5
      %p196 = pnand %p194, %p195
      %p197 = pneg %p196
      // Predicated region
      $region9: #{baseline_distortion_forward.1} parent=5 // pred_check
        _
      $region10: #{baseline_distortion_forward.1} parent=5 // pred_check_branch
        %199 = sbr.rel (%p196) target = $region12
      $region11: #{baseline_distortion_forward.1} parent=5 // pred_region
        %s200 = ssub.s32 %s15, 1
        // Predicated region
        $region13: #{baseline_distortion_forward.1} parent=11 // pred_check
          %p201 = pneg %p76
        $region14: #{baseline_distortion_forward.1} parent=11 // pred_check_branch
          %203 = sbr.rel (%p201) target = $region16
        $region15: #{baseline_distortion_forward.1} parent=11 // pred_region
          _
        $region16: #{baseline_distortion_forward.1} parent=11 // pred_fallthru
          _
        // Predicated region
        $region17: #{baseline_distortion_forward.1} parent=11 // pred_check
          %p204 = pneg %p97
        $region18: #{baseline_distortion_forward.1} parent=11 // pred_check_branch
          %206 = sbr.rel (%p204) target = $region20
        $region19: #{baseline_distortion_forward.1} parent=11 // pred_region
          _
        $region20: #{baseline_distortion_forward.1} parent=11 // pred_fallthru
          _
        // Predicated region
        $region21: #{baseline_distortion_forward.1} parent=11 // pred_check
          %p207 = pneg %p118
        $region22: #{baseline_distortion_forward.1} parent=11 // pred_check_branch
          %209 = sbr.rel (%p207) target = $region24
        $region23: #{baseline_distortion_forward.1} parent=11 // pred_region
          _
        $region24: #{baseline_distortion_forward.1} parent=11 // pred_fallthru
          _
        // Predicated region
        $region25: #{baseline_distortion_forward.1} parent=11 // pred_check
          %p210 = pneg %p139
        $region26: #{baseline_distortion_forward.1} parent=11 // pred_check_branch
          %212 = sbr.rel (%p210) target = $region28
        $region27: #{baseline_distortion_forward.1} parent=11 // pred_region
          _
        $region28: #{baseline_distortion_forward.1} parent=11 // pred_fallthru
          _
        // Predicated region
        $region29: #{baseline_distortion_forward.1} parent=11 // pred_check
          %p213 = pneg %p160
        $region30: #{baseline_distortion_forward.1} parent=11 // pred_check_branch
          %215 = sbr.rel (%p213) target = $region32
        $region31: #{baseline_distortion_forward.1} parent=11 // pred_region
          _
        $region32: #{baseline_distortion_forward.1} parent=11 // pred_fallthru
          _
      $region12: #{baseline_distortion_forward.1} parent=5 // pred_fallthru
        _
      %p216 = scmp.lt.s32.totalorder %s15, 4
      // Predicated region
      $region33: #{baseline_distortion_forward.1} parent=5 // pred_check
        %p217 = pneg %p216
      $region34: #{baseline_distortion_forward.1} parent=5 // pred_check_branch
        %219 = sbr.rel (%p217) target = $region36
      $region35: #{baseline_distortion_forward.1} parent=5 // pred_region
        // Predicated region
        $region37: #{baseline_distortion_forward.1} parent=35 // pred_check
          %p220 = pneg %p49
        $region38: #{baseline_distortion_forward.1} parent=35 // pred_check_branch
          %222 = sbr.rel (%p220) target = $region40
        $region39: #{baseline_distortion_forward.1} parent=35 // pred_region
          %p223 = scmp.lt.s32.totalorder %s22, 1
          %s224 = scalar_select %p223, %s22, 1
          %p225 = scmp.lt.s32.totalorder %s23, 1
          %s226 = scalar_select %p225, %s23, 1
          %s227 = smul.addr %s226, 30
          %s228 = smul.addr %s224, 60
          %s229 = sadd.s32 %s227, %s228
          %s230 = smul.addr %s229, 4
          %s231 = scalar_lea.vmem %s0, %s230
        $region40: #{baseline_distortion_forward.1} parent=35 // pred_fallthru
          _
      $region36: #{baseline_distortion_forward.1} parent=5 // pred_fallthru
        _
      %p232 = scmp.le.s32.totalorder 1, %s15
      %p233 = scmp.lt.s32.totalorder %s15, 5
      %p234 = pnand %p232, %p233
      %p235 = pneg %p234
      // Predicated region
      $region41: #{baseline_distortion_forward.1} parent=5 // pred_check
        _
      $region42: #{baseline_distortion_forward.1} parent=5 // pred_check_branch
        %237 = sbr.rel (%p234) target = $region44
      $region43: #{baseline_distortion_forward.1} parent=5 // pred_region
        %s238 = ssub.s32 %s15, 1
        %p239 = scmp.lt.s32.totalorder %s24, 1
        %s240 = scalar_select %p239, %s24, 1
        %p241 = scmp.lt.s32.totalorder %s25, 1
        %s242 = scalar_select %p241, %s25, 1
        %s243 = smul.addr %s242, 30
        %s244 = smul.addr %s240, 60
        %s245 = sadd.s32 %s243, %s244
        %s246 = smul.addr %s245, 4
        %s247 = scalar_lea.vmem %s0, %s246
        %p248 = pneg %p55
        %p249 = pneg %p52
        %p250 = pneg %p76
        %p251 = pneg %p73
        %p252 = pneg %p97
        %p253 = pneg %p94
        %p254 = pneg %p118
        %p255 = pneg %p115
        %p256 = pneg %p139
        %p257 = pneg %p136
        %p258 = pneg %p160
        %p259 = pneg %p157
        %p260 = pneg %p186
        %p261 = pneg %p183
        %s262 = sand.u32 %s173, 1
        %s263 = scalar_lea.sflag [#allocation4], %s262
        %s264 = sand.u32 %s173, 1
        %s265 = scalar_lea.vmem [#allocation3], %s264
        %p266 = scmp.lt.s32.totalorder %s24, 1
        %s267 = scalar_select %p266, %s24, 1
        %p268 = scmp.lt.s32.totalorder %s25, 1
        %s269 = scalar_select %p268, %s25, 1
        %s270 = smul.addr %s269, 30
        %s271 = smul.addr %s267, 60
        %s272 = sadd.s32 %s270, %s271
        %s273 = smul.addr %s272, 4
        %s274 = scalar_lea.vmem %s0, %s273
        %p276 = scmp.eq.s32.totalorder %s25, 0
        // Predicated region
        $region45: #{baseline_distortion_forward.1} parent=43 // pred_check
          %p277 = pneg %p276
        $region46: #{baseline_distortion_forward.1} parent=43 // pred_check_branch
          %279 = sbr.rel (%p277) target = $region48
        $region47: #{baseline_distortion_forward.1} parent=43 // pred_region
          %280 = vst [vmem:[#allocation2] sm:$0x1] 0.0
        $region48: #{baseline_distortion_forward.1} parent=43 // pred_fallthru
          _
        %v281 = vld [vmem:[%s274] sm:$0xf]
        %v282 = vld [vmem:[%s274 + $0x4] sm:$0xf]
        %v283 = vld [vmem:[%s274 + $0x8] sm:$0x1]
        %v284 = vld [vmem:[%s274 + $0xc] sm:$0xf]
        %v285 = vld [vmem:[%s274 + $0x10] sm:$0xf]
        %v286 = vld [vmem:[%s274 + $0x14] sm:$0x1]
        %v287 = vld [vmem:[%s274 + $0x18] sm:$0xf]
        %v288 = vld [vmem:[%s274 + $0x1c] sm:$0xf]
        %v289 = vld [vmem:[%s274 + $0x20] sm:$0x1]
        %v290 = vld [vmem:[%s274 + $0x24] sm:$0xf]
        %v291 = vld [vmem:[%s274 + $0x28] sm:$0xf]
        %v292 = vld [vmem:[%s274 + $0x2c] sm:$0x1]
        %v293 = vld [vmem:[%s274 + $0x30] sm:$0xf]
        %v294 = vld [vmem:[%s274 + $0x34] sm:$0xf]
        %v295 = vld [vmem:[%s274 + $0x38] sm:$0x1]
        %v296 = vld [vmem:[%s274 + $0x3c] sm:$0xf]
        %v297 = vld [vmem:[%s274 + $0x40] sm:$0xf]
        %v298 = vld [vmem:[%s274 + $0x44] sm:$0x1]
        %v299 = vld [vmem:[%s274 + $0x48] sm:$0xf]
        %v300 = vld [vmem:[%s274 + $0x4c] sm:$0xf]
        %v301 = vld [vmem:[%s274 + $0x50] sm:$0x1]
        %v302 = vld [vmem:[%s274 + $0x54] sm:$0xf]
        %v303 = vld [vmem:[%s274 + $0x58] sm:$0xf]
        %v304 = vld [vmem:[%s274 + $0x5c] sm:$0x1]
        %v305 = vld [vmem:[%s274 + $0x60] sm:$0xf]
        %v306 = vld [vmem:[%s274 + $0x64] sm:$0xf]
        %v307 = vld [vmem:[%s274 + $0x68] sm:$0x1]
        %v308 = vld [vmem:[%s274 + $0x6c] sm:$0xf]
        %v309 = vld [vmem:[%s274 + $0x70] sm:$0xf]
        %v310 = vld [vmem:[%s274 + $0x74] sm:$0x1]
        %v311 = vld [vmem:[%s1] sm:$0xf]
        %v312 = vld [vmem:[%s1 + $0x4] sm:$0xf]
        %v313 = vld [vmem:[%s1 + $0x8] sm:$0xf]
        %v314 = vld [vmem:[%s1 + $0xc] sm:$0xf]
        %v315 = vld [vmem:[%s1 + $0x10] sm:$0xf]
        %v316 = vld [vmem:[%s1 + $0x14] sm:$0xf]
        %v317 = vld [vmem:[%s1 + $0x18] sm:$0xf]
        %v318 = vld [vmem:[%s1 + $0x1c] sm:$0xf]
        %v319 = vld [vmem:[%s1 + $0x20] sm:$0xf]
        %vm320 = vsmask.f32 3328
        %vm321 = vsmask.f32 7440
        %vm322 = vmor %vm320, %vm321
        %v324 = vshrl.u32 %v281, 16
        %v326 = vrot.slane %v324, 4
        %v327 = vshll.u32 %v281, 16
        %v329 = vrot.slane %v327, 5
        %v330 = vor.u32 %v326, %v329
        %v331 = vrot.slane %v330, 4
        %v333 = vshll.u32 %v282, 16
        %v335 = vrot.slane %v333, 5
        %v336 = vsel %vm322, %v331, %v335
        %v337 = vshrl.u32 %v282, 16
        %v339 = vrot.slane %v337, 4
        %v340 = vor.u32 %v339, %v335
        %v341 = vrot.slane %v340, 4
        %v343 = vshll.u32 %v283, 16
        %v345 = vrot.slane %v343, 5
        %v346 = vsel %vm322, %v341, %v345
        %v348 = vshrl.u32 %v284, 16
        %v350 = vrot.slane %v348, 4
        %v351 = vshll.u32 %v284, 16
        %v353 = vrot.slane %v351, 5
        %v354 = vor.u32 %v350, %v353
        %v355 = vrot.slane %v354, 4
        %v357 = vshll.u32 %v285, 16
        %v359 = vrot.slane %v357, 5
        %v360 = vsel %vm322, %v355, %v359
        %v361 = vshrl.u32 %v285, 16
        %v363 = vrot.slane %v361, 4
        %v364 = vor.u32 %v363, %v359
        %v365 = vrot.slane %v364, 4
        %v367 = vshll.u32 %v286, 16
        %v369 = vrot.slane %v367, 5
        %v370 = vsel %vm322, %v365, %v369
        %v372 = vshrl.u32 %v287, 16
        %v374 = vrot.slane %v372, 4
        %v375 = vshll.u32 %v287, 16
        %v377 = vrot.slane %v375, 5
        %v378 = vor.u32 %v374, %v377
        %v379 = vrot.slane %v378, 4
        %v381 = vshll.u32 %v288, 16
        %v383 = vrot.slane %v381, 5
        %v384 = vsel %vm322, %v379, %v383
        %v385 = vshrl.u32 %v288, 16
        %v387 = vrot.slane %v385, 4
        %v388 = vor.u32 %v387, %v383
        %v389 = vrot.slane %v388, 4
        %v391 = vshll.u32 %v289, 16
        %v393 = vrot.slane %v391, 5
        %v394 = vsel %vm322, %v389, %v393
        %v396 = vshrl.u32 %v290, 16
        %v398 = vrot.slane %v396, 4
        %v399 = vshll.u32 %v290, 16
        %v401 = vrot.slane %v399, 5
        %v402 = vor.u32 %v398, %v401
        %v403 = vrot.slane %v402, 4
        %v405 = vshll.u32 %v291, 16
        %v407 = vrot.slane %v405, 5
        %v408 = vsel %vm322, %v403, %v407
        %v409 = vshrl.u32 %v291, 16
        %v411 = vrot.slane %v409, 4
        %v412 = vor.u32 %v411, %v407
        %v413 = vrot.slane %v412, 4
        %v415 = vshll.u32 %v292, 16
        %v417 = vrot.slane %v415, 5
        %v418 = vsel %vm322, %v413, %v417
        %v420 = vshrl.u32 %v293, 16
        %v422 = vrot.slane %v420, 4
        %v423 = vshll.u32 %v293, 16
        %v425 = vrot.slane %v423, 5
        %v426 = vor.u32 %v422, %v425
        %v427 = vrot.slane %v426, 4
        %v429 = vshll.u32 %v294, 16
        %v431 = vrot.slane %v429, 5
        %v432 = vsel %vm322, %v427, %v431
        %v433 = vshrl.u32 %v294, 16
        %v435 = vrot.slane %v433, 4
        %v436 = vor.u32 %v435, %v431
        %v437 = vrot.slane %v436, 4
        %v439 = vshll.u32 %v295, 16
        %v441 = vrot.slane %v439, 5
        %v442 = vsel %vm322, %v437, %v441
        %v444 = vshrl.u32 %v296, 16
        %v446 = vrot.slane %v444, 4
        %v447 = vshll.u32 %v296, 16
        %v449 = vrot.slane %v447, 5
        %v450 = vor.u32 %v446, %v449
        %v451 = vrot.slane %v450, 4
        %v453 = vshll.u32 %v297, 16
        %v455 = vrot.slane %v453, 5
        %v456 = vsel %vm322, %v451, %v455
        %v457 = vshrl.u32 %v297, 16
        %v459 = vrot.slane %v457, 4
        %v460 = vor.u32 %v459, %v455
        %v461 = vrot.slane %v460, 4
        %v463 = vshll.u32 %v298, 16
        %v465 = vrot.slane %v463, 5
        %v466 = vsel %vm322, %v461, %v465
        %v468 = vshrl.u32 %v299, 16
        %v470 = vrot.slane %v468, 4
        %v471 = vshll.u32 %v299, 16
        %v473 = vrot.slane %v471, 5
        %v474 = vor.u32 %v470, %v473
        %v475 = vrot.slane %v474, 4
        %v477 = vshll.u32 %v300, 16
        %v479 = vrot.slane %v477, 5
        %v480 = vsel %vm322, %v475, %v479
        %v481 = vshrl.u32 %v300, 16
        %v483 = vrot.slane %v481, 4
        %v484 = vor.u32 %v483, %v479
        %v485 = vrot.slane %v484, 4
        %v487 = vshll.u32 %v301, 16
        %v489 = vrot.slane %v487, 5
        %v490 = vsel %vm322, %v485, %v489
        %v492 = vshrl.u32 %v302, 16
        %v494 = vrot.slane %v492, 4
        %v495 = vshll.u32 %v302, 16
        %v497 = vrot.slane %v495, 5
        %v498 = vor.u32 %v494, %v497
        %v499 = vrot.slane %v498, 4
        %v501 = vshll.u32 %v303, 16
        %v503 = vrot.slane %v501, 5
        %v504 = vsel %vm322, %v499, %v503
        %v505 = vshrl.u32 %v303, 16
        %v507 = vrot.slane %v505, 4
        %v508 = vor.u32 %v507, %v503
        %v509 = vrot.slane %v508, 4
        %v511 = vshll.u32 %v304, 16
        %v513 = vrot.slane %v511, 5
        %v514 = vsel %vm322, %v509, %v513
        %v515 = vunpack.c.l.b16 %v336
        %v516 = vunpack.c.l.b16 %v346
        %v517 = vunpack.c.l.b16 %v360
        %v518 = vunpack.c.l.b16 %v370
        %v519 = vunpack.c.l.b16 %v384
        %v520 = vunpack.c.l.b16 %v394
        %v521 = vunpack.c.l.b16 %v408
        %v522 = vunpack.c.l.b16 %v418
        %v523 = vunpack.c.l.b16 %v432
        %v524 = vunpack.c.l.b16 %v442
        %v525 = vunpack.c.l.b16 %v456
        %v526 = vunpack.c.l.b16 %v466
        %v527 = vunpack.c.l.b16 %v480
        %v528 = vunpack.c.l.b16 %v490
        %v529 = vunpack.c.l.b16 %v504
        %v530 = vunpack.c.l.b16 %v514
        %v531 = vpack.c.b16 %v516, %v515
        %v532 = vpack.c.b16 %v518, %v517
        %v533 = vpack.c.b16 %v520, %v519
        %v534 = vpack.c.b16 %v522, %v521
        %v535 = vpack.c.b16 %v524, %v523
        %v536 = vpack.c.b16 %v526, %v525
        %v537 = vpack.c.b16 %v528, %v527
        %v538 = vpack.c.b16 %v530, %v529
        %vm539 = vcmask 64512
        %v541 = vsel %vm539, %v531, 0
        %v544 = vsel %vm539, %v532, 0
        %v547 = vsel %vm539, %v533, 0
        %v550 = vsel %vm539, %v534, 0
        %v553 = vsel %vm539, %v535, 0
        %v556 = vsel %vm539, %v536, 0
        %v559 = vsel %vm539, %v537, 0
        %v562 = vsel %vm539, %v538, 0
        %vm564 = vcmask 1043456
        %v566 = vsel %vm564, %v312, 0
        %568 = vmatprep.subr.bf16.mxu0 0
        %569 = vmatpush1.bf16.msra.mxu0 0
        %570 = vmatprep.subr.bf16.mxu0 0
        %571 = vmatpush1.bf16.msra.mxu0 0
        %572 = vmatprep.subr.bf16.mxu0 0
        %573 = vmatpush1.bf16.msra.mxu0 0
        %574 = vmatprep.subr.bf16.mxu0 0
        %575 = vmatpush1.bf16.msra.mxu0 0
        %576 = vmatprep.subr.bf16.mxu0 0
        %577 = vmatpush1.bf16.msra.mxu0 0
        %578 = vmatprep.subr.bf16.mxu0 0
        %579 = vmatpush1.bf16.msra.mxu0 0
        %580 = vmatprep.subr.bf16.mxu0 0
        %581 = vmatpush1.bf16.msra.mxu0 0
        %582 = vmatprep.subr.bf16.mxu0 0
        %583 = vmatpush1.bf16.msra.mxu0 %v566
        %584 = vmatprep.subr.bf16.mxu0 0
        %585 = vmatpush2.bf16.msra.mxu0 0
        %586 = vmatprep.subr.bf16.mxu0 0
        %587 = vmatpush2.bf16.msra.mxu0 0
        %588 = vmatprep.subr.bf16.mxu0 0
        %589 = vmatpush2.bf16.msra.mxu0 0
        %590 = vmatprep.subr.bf16.mxu0 0
        %591 = vmatpush2.bf16.msra.mxu0 0
        %592 = vmatprep.subr.bf16.mxu0 0
        %593 = vmatpush2.bf16.msra.mxu0 0
        %594 = vmatprep.subr.bf16.mxu0 0
        %595 = vmatpush2.bf16.msra.mxu0 0
        %596 = vmatprep.subr.bf16.mxu0 0
        %597 = vmatpush2.bf16.msra.mxu0 0
        %598 = vmatprep.subr.bf16.mxu0 0
        %599 = vmatpush2.bf16.msra.mxu0 0
        %600 = vmatprep.mubr.bf16.mxu0 0
        %601 = vmatmul.mubr.bf16.gmra.mxu0 %v541
        %v602 = vpop.f32.mrf.mxu0
        %v603 = vadd.f32 0.0, %v602
        %v604 = vpop.f32.mrf.mxu0
        %v605 = vpop.f32.mrf.mxu0
        %v606 = vadd.f32 0.0, %v605
        %v607 = vpop.f32.mrf.mxu0
        %608 = vmatprep.mubr.bf16.mxu0 0
        %609 = vmatmul.mubr.bf16.gmra.mxu0 %v544
        %v610 = vpop.f32.mrf.mxu0
        %v611 = vadd.f32 0.0, %v610
        %v612 = vpop.f32.mrf.mxu0
        %v613 = vpop.f32.mrf.mxu0
        %v614 = vadd.f32 0.0, %v613
        %v615 = vpop.f32.mrf.mxu0
        %616 = vmatprep.mubr.bf16.mxu0 0
        %617 = vmatmul.mubr.bf16.gmra.mxu0 %v547
        %v618 = vpop.f32.mrf.mxu0
        %v619 = vadd.f32 0.0, %v618
        %v620 = vpop.f32.mrf.mxu0
        %v621 = vpop.f32.mrf.mxu0
        %v622 = vadd.f32 0.0, %v621
        %v623 = vpop.f32.mrf.mxu0
        %624 = vmatprep.mubr.bf16.mxu0 0
        %625 = vmatmul.mubr.bf16.gmra.mxu0 %v550
        %v626 = vpop.f32.mrf.mxu0
        %v627 = vadd.f32 0.0, %v626
        %v628 = vpop.f32.mrf.mxu0
        %v629 = vpop.f32.mrf.mxu0
        %v630 = vadd.f32 0.0, %v629
        %v631 = vpop.f32.mrf.mxu0
        %632 = vmatprep.mubr.bf16.mxu0 0
        %633 = vmatmul.mubr.bf16.gmra.mxu0 %v553
        %v634 = vpop.f32.mrf.mxu0
        %v635 = vadd.f32 0.0, %v634
        %v636 = vpop.f32.mrf.mxu0
        %v637 = vpop.f32.mrf.mxu0
        %v638 = vadd.f32 0.0, %v637
        %v639 = vpop.f32.mrf.mxu0
        %640 = vmatprep.mubr.bf16.mxu0 0
        %641 = vmatmul.mubr.bf16.gmra.mxu0 %v556
        %v642 = vpop.f32.mrf.mxu0
        %v643 = vadd.f32 0.0, %v642
        %v644 = vpop.f32.mrf.mxu0
        %v645 = vpop.f32.mrf.mxu0
        %v646 = vadd.f32 0.0, %v645
        %v647 = vpop.f32.mrf.mxu0
        %648 = vmatprep.mubr.bf16.mxu0 0
        %649 = vmatmul.mubr.bf16.gmra.mxu0 %v559
        %v650 = vpop.f32.mrf.mxu0
        %v651 = vadd.f32 0.0, %v650
        %v652 = vpop.f32.mrf.mxu0
        %v653 = vpop.f32.mrf.mxu0
        %v654 = vadd.f32 0.0, %v653
        %v655 = vpop.f32.mrf.mxu0
        %656 = vmatprep.mubr.bf16.mxu0 0
        %657 = vmatmul.mubr.bf16.gmra.mxu0 %v562
        %v658 = vpop.f32.mrf.mxu0
        %v659 = vadd.f32 0.0, %v658
        %v660 = vpop.f32.mrf.mxu0
        %v661 = vpop.f32.mrf.mxu0
        %v662 = vadd.f32 0.0, %v661
        %v663 = vpop.f32.mrf.mxu0
        %664 = vdwg.mxu0
        %v681 = vunpack.c.l.b16 %v281
        %v682 = vunpack.c.l.b16 %v282
        %v683 = vunpack.c.l.b16 %v284
        %v684 = vunpack.c.l.b16 %v285
        %v685 = vunpack.c.l.b16 %v287
        %v686 = vunpack.c.l.b16 %v288
        %v687 = vunpack.c.l.b16 %v290
        %v688 = vunpack.c.l.b16 %v291
        %v689 = vunpack.c.l.b16 %v293
        %v690 = vunpack.c.l.b16 %v294
        %v691 = vunpack.c.l.b16 %v296
        %v692 = vunpack.c.l.b16 %v297
        %v693 = vunpack.c.l.b16 %v299
        %v694 = vunpack.c.l.b16 %v300
        %v695 = vunpack.c.l.b16 %v302
        %v696 = vunpack.c.l.b16 %v303
        %v697 = vpack.c.b16 %v682, %v681
        %v698 = vpack.c.b16 %v684, %v683
        %v699 = vpack.c.b16 %v686, %v685
        %v700 = vpack.c.b16 %v688, %v687
        %v701 = vpack.c.b16 %v690, %v689
        %v702 = vpack.c.b16 %v692, %v691
        %v703 = vpack.c.b16 %v694, %v693
        %v704 = vpack.c.b16 %v696, %v695
        %v706 = vsel %vm539, %v697, 0
        %v709 = vsel %vm539, %v698, 0
        %v712 = vsel %vm539, %v699, 0
        %v715 = vsel %vm539, %v700, 0
        %v718 = vsel %vm539, %v701, 0
        %v721 = vsel %vm539, %v702, 0
        %v724 = vsel %vm539, %v703, 0
        %v727 = vsel %vm539, %v704, 0
        %v730 = vsel %vm564, %v311, 0
        %732 = vmatprep.subr.bf16.mxu0 0
        %733 = vmatpush1.bf16.msra.mxu0 0
        %734 = vmatprep.subr.bf16.mxu0 0
        %735 = vmatpush1.bf16.msra.mxu0 0
        %736 = vmatprep.subr.bf16.mxu0 0
        %737 = vmatpush1.bf16.msra.mxu0 0
        %738 = vmatprep.subr.bf16.mxu0 0
        %739 = vmatpush1.bf16.msra.mxu0 0
        %740 = vmatprep.subr.bf16.mxu0 0
        %741 = vmatpush1.bf16.msra.mxu0 0
        %742 = vmatprep.subr.bf16.mxu0 0
        %743 = vmatpush1.bf16.msra.mxu0 0
        %744 = vmatprep.subr.bf16.mxu0 0
        %745 = vmatpush1.bf16.msra.mxu0 0
        %746 = vmatprep.subr.bf16.mxu0 0
        %747 = vmatpush1.bf16.msra.mxu0 %v730
        %748 = vmatprep.subr.bf16.mxu0 0
        %749 = vmatpush2.bf16.msra.mxu0 0
        %750 = vmatprep.subr.bf16.mxu0 0
        %751 = vmatpush2.bf16.msra.mxu0 0
        %752 = vmatprep.subr.bf16.mxu0 0
        %753 = vmatpush2.bf16.msra.mxu0 0
        %754 = vmatprep.subr.bf16.mxu0 0
        %755 = vmatpush2.bf16.msra.mxu0 0
        %756 = vmatprep.subr.bf16.mxu0 0
        %757 = vmatpush2.bf16.msra.mxu0 0
        %758 = vmatprep.subr.bf16.mxu0 0
        %759 = vmatpush2.bf16.msra.mxu0 0
        %760 = vmatprep.subr.bf16.mxu0 0
        %761 = vmatpush2.bf16.msra.mxu0 0
        %762 = vmatprep.subr.bf16.mxu0 0
        %763 = vmatpush2.bf16.msra.mxu0 0
        %764 = vmatprep.mubr.bf16.mxu0 0
        %765 = vmatmul.mubr.bf16.gmra.mxu0 %v706
        %v766 = vpop.f32.mrf.mxu0
        %v767 = vadd.f32 %v603, %v766
        %v768 = vpop.f32.mrf.mxu0
        %v769 = vpop.f32.mrf.mxu0
        %v770 = vadd.f32 %v606, %v769
        %v771 = vpop.f32.mrf.mxu0
        %772 = vmatprep.mubr.bf16.mxu0 0
        %773 = vmatmul.mubr.bf16.gmra.mxu0 %v709
        %v774 = vpop.f32.mrf.mxu0
        %v775 = vadd.f32 %v611, %v774
        %v776 = vpop.f32.mrf.mxu0
        %v777 = vpop.f32.mrf.mxu0
        %v778 = vadd.f32 %v614, %v777
        %v779 = vpop.f32.mrf.mxu0
        %780 = vmatprep.mubr.bf16.mxu0 0
        %781 = vmatmul.mubr.bf16.gmra.mxu0 %v712
        %v782 = vpop.f32.mrf.mxu0
        %v783 = vadd.f32 %v619, %v782
        %v784 = vpop.f32.mrf.mxu0
        %v785 = vpop.f32.mrf.mxu0
        %v786 = vadd.f32 %v622, %v785
        %v787 = vpop.f32.mrf.mxu0
        %788 = vmatprep.mubr.bf16.mxu0 0
        %789 = vmatmul.mubr.bf16.gmra.mxu0 %v715
        %v790 = vpop.f32.mrf.mxu0
        %v791 = vadd.f32 %v627, %v790
        %v792 = vpop.f32.mrf.mxu0
        %v793 = vpop.f32.mrf.mxu0
        %v794 = vadd.f32 %v630, %v793
        %v795 = vpop.f32.mrf.mxu0
        %796 = vmatprep.mubr.bf16.mxu0 0
        %797 = vmatmul.mubr.bf16.gmra.mxu0 %v718
        %v798 = vpop.f32.mrf.mxu0
        %v799 = vadd.f32 %v635, %v798
        %v800 = vpop.f32.mrf.mxu0
        %v801 = vpop.f32.mrf.mxu0
        %v802 = vadd.f32 %v638, %v801
        %v803 = vpop.f32.mrf.mxu0
        %804 = vmatprep.mubr.bf16.mxu0 0
        %805 = vmatmul.mubr.bf16.gmra.mxu0 %v721
        %v806 = vpop.f32.mrf.mxu0
        %v807 = vadd.f32 %v643, %v806
        %v808 = vpop.f32.mrf.mxu0
        %v809 = vpop.f32.mrf.mxu0
        %v810 = vadd.f32 %v646, %v809
        %v811 = vpop.f32.mrf.mxu0
        %812 = vmatprep.mubr.bf16.mxu0 0
        %813 = vmatmul.mubr.bf16.gmra.mxu0 %v724
        %v814 = vpop.f32.mrf.mxu0
        %v815 = vadd.f32 %v651, %v814
        %v816 = vpop.f32.mrf.mxu0
        %v817 = vpop.f32.mrf.mxu0
        %v818 = vadd.f32 %v654, %v817
        %v819 = vpop.f32.mrf.mxu0
        %820 = vmatprep.mubr.bf16.mxu0 0
        %821 = vmatmul.mubr.bf16.gmra.mxu0 %v727
        %v822 = vpop.f32.mrf.mxu0
        %v823 = vadd.f32 %v659, %v822
        %v824 = vpop.f32.mrf.mxu0
        %v825 = vpop.f32.mrf.mxu0
        %v826 = vadd.f32 %v662, %v825
        %v827 = vpop.f32.mrf.mxu0
        %828 = vdwg.mxu0
        %vm837 = vcmask 1042432
        %vm838 = vcmask 1046532
        %vm839 = vmor %vm837, %vm838
        %v840 = vrot.slane %v281, 5
        %v841 = vrot.slane %v840, 4
        %v842 = vrot.slane %v282, 5
        %v843 = vsel %vm839, %v841, %v842
        %v844 = vrot.slane %v842, 4
        %v845 = vrot.slane %v283, 5
        %v846 = vsel %vm839, %v844, %v845
        %v847 = vrot.slane %v284, 5
        %v848 = vrot.slane %v847, 4
        %v849 = vrot.slane %v285, 5
        %v850 = vsel %vm839, %v848, %v849
        %v851 = vrot.slane %v849, 4
        %v852 = vrot.slane %v286, 5
        %v853 = vsel %vm839, %v851, %v852
        %v854 = vrot.slane %v287, 5
        %v855 = vrot.slane %v854, 4
        %v856 = vrot.slane %v288, 5
        %v857 = vsel %vm839, %v855, %v856
        %v858 = vrot.slane %v856, 4
        %v859 = vrot.slane %v289, 5
        %v860 = vsel %vm839, %v858, %v859
        %v861 = vrot.slane %v290, 5
        %v862 = vrot.slane %v861, 4
        %v863 = vrot.slane %v291, 5
        %v864 = vsel %vm839, %v862, %v863
        %v865 = vrot.slane %v863, 4
        %v866 = vrot.slane %v292, 5
        %v867 = vsel %vm839, %v865, %v866
        %v868 = vrot.slane %v293, 5
        %v869 = vrot.slane %v868, 4
        %v870 = vrot.slane %v294, 5
        %v871 = vsel %vm839, %v869, %v870
        %v872 = vrot.slane %v870, 4
        %v873 = vrot.slane %v295, 5
        %v874 = vsel %vm839, %v872, %v873
        %v875 = vrot.slane %v296, 5
        %v876 = vrot.slane %v875, 4
        %v877 = vrot.slane %v297, 5
        %v878 = vsel %vm839, %v876, %v877
        %v879 = vrot.slane %v877, 4
        %v880 = vrot.slane %v298, 5
        %v881 = vsel %vm839, %v879, %v880
        %v882 = vrot.slane %v299, 5
        %v883 = vrot.slane %v882, 4
        %v884 = vrot.slane %v300, 5
        %v885 = vsel %vm839, %v883, %v884
        %v886 = vrot.slane %v884, 4
        %v887 = vrot.slane %v301, 5
        %v888 = vsel %vm839, %v886, %v887
        %v889 = vrot.slane %v302, 5
        %v890 = vrot.slane %v889, 4
        %v891 = vrot.slane %v303, 5
        %v892 = vsel %vm839, %v890, %v891
        %v893 = vrot.slane %v891, 4
        %v894 = vrot.slane %v304, 5
        %v895 = vsel %vm839, %v893, %v894
        %v896 = vunpack.c.l.b16 %v843
        %v897 = vunpack.c.l.b16 %v846
        %v898 = vunpack.c.l.b16 %v850
        %v899 = vunpack.c.l.b16 %v853
        %v900 = vunpack.c.l.b16 %v857
        %v901 = vunpack.c.l.b16 %v860
        %v902 = vunpack.c.l.b16 %v864
        %v903 = vunpack.c.l.b16 %v867
        %v904 = vunpack.c.l.b16 %v871
        %v905 = vunpack.c.l.b16 %v874
        %v906 = vunpack.c.l.b16 %v878
        %v907 = vunpack.c.l.b16 %v881
        %v908 = vunpack.c.l.b16 %v885
        %v909 = vunpack.c.l.b16 %v888
        %v910 = vunpack.c.l.b16 %v892
        %v911 = vunpack.c.l.b16 %v895
        %v912 = vpack.c.b16 %v897, %v896
        %v913 = vpack.c.b16 %v899, %v898
        %v914 = vpack.c.b16 %v901, %v900
        %v915 = vpack.c.b16 %v903, %v902
        %v916 = vpack.c.b16 %v905, %v904
        %v917 = vpack.c.b16 %v907, %v906
        %v918 = vpack.c.b16 %v909, %v908
        %v919 = vpack.c.b16 %v911, %v910
        %v921 = vsel %vm539, %v912, 0
        %v924 = vsel %vm539, %v913, 0
        %v927 = vsel %vm539, %v914, 0
        %v930 = vsel %vm539, %v915, 0
        %v933 = vsel %vm539, %v916, 0
        %v936 = vsel %vm539, %v917, 0
        %v939 = vsel %vm539, %v918, 0
        %v942 = vsel %vm539, %v919, 0
        %v945 = vsel %vm564, %v313, 0
        %947 = vmatprep.subr.bf16.mxu0 0
        %948 = vmatpush1.bf16.msra.mxu0 0
        %949 = vmatprep.subr.bf16.mxu0 0
        %950 = vmatpush1.bf16.msra.mxu0 0
        %951 = vmatprep.subr.bf16.mxu0 0
        %952 = vmatpush1.bf16.msra.mxu0 0
        %953 = vmatprep.subr.bf16.mxu0 0
        %954 = vmatpush1.bf16.msra.mxu0 0
        %955 = vmatprep.subr.bf16.mxu0 0
        %956 = vmatpush1.bf16.msra.mxu0 0
        %957 = vmatprep.subr.bf16.mxu0 0
        %958 = vmatpush1.bf16.msra.mxu0 0
        %959 = vmatprep.subr.bf16.mxu0 0
        %960 = vmatpush1.bf16.msra.mxu0 0
        %961 = vmatprep.subr.bf16.mxu0 0
        %962 = vmatpush1.bf16.msra.mxu0 %v945
        %963 = vmatprep.subr.bf16.mxu0 0
        %964 = vmatpush2.bf16.msra.mxu0 0
        %965 = vmatprep.subr.bf16.mxu0 0
        %966 = vmatpush2.bf16.msra.mxu0 0
        %967 = vmatprep.subr.bf16.mxu0 0
        %968 = vmatpush2.bf16.msra.mxu0 0
        %969 = vmatprep.subr.bf16.mxu0 0
        %970 = vmatpush2.bf16.msra.mxu0 0
        %971 = vmatprep.subr.bf16.mxu0 0
        %972 = vmatpush2.bf16.msra.mxu0 0
        %973 = vmatprep.subr.bf16.mxu0 0
        %974 = vmatpush2.bf16.msra.mxu0 0
        %975 = vmatprep.subr.bf16.mxu0 0
        %976 = vmatpush2.bf16.msra.mxu0 0
        %977 = vmatprep.subr.bf16.mxu0 0
        %978 = vmatpush2.bf16.msra.mxu0 0
        %979 = vmatprep.mubr.bf16.mxu0 0
        %980 = vmatmul.mubr.bf16.gmra.mxu0 %v921
        %v981 = vpop.f32.mrf.mxu0
        %v982 = vadd.f32 0.0, %v981
        %v983 = vpop.f32.mrf.mxu0
        %v984 = vpop.f32.mrf.mxu0
        %v985 = vadd.f32 0.0, %v984
        %v986 = vpop.f32.mrf.mxu0
        %987 = vmatprep.mubr.bf16.mxu0 0
        %988 = vmatmul.mubr.bf16.gmra.mxu0 %v924
        %v989 = vpop.f32.mrf.mxu0
        %v990 = vadd.f32 0.0, %v989
        %v991 = vpop.f32.mrf.mxu0
        %v992 = vpop.f32.mrf.mxu0
        %v993 = vadd.f32 0.0, %v992
        %v994 = vpop.f32.mrf.mxu0
        %995 = vmatprep.mubr.bf16.mxu0 0
        %996 = vmatmul.mubr.bf16.gmra.mxu0 %v927
        %v997 = vpop.f32.mrf.mxu0
        %v998 = vadd.f32 0.0, %v997
        %v999 = vpop.f32.mrf.mxu0
        %v1000 = vpop.f32.mrf.mxu0
        %v1001 = vadd.f32 0.0, %v1000
        %v1002 = vpop.f32.mrf.mxu0
        %1003 = vmatprep.mubr.bf16.mxu0 0
        %1004 = vmatmul.mubr.bf16.gmra.mxu0 %v930
        %v1005 = vpop.f32.mrf.mxu0
        %v1006 = vadd.f32 0.0, %v1005
        %v1007 = vpop.f32.mrf.mxu0
        %v1008 = vpop.f32.mrf.mxu0
        %v1009 = vadd.f32 0.0, %v1008
        %v1010 = vpop.f32.mrf.mxu0
        %1011 = vmatprep.mubr.bf16.mxu0 0
        %1012 = vmatmul.mubr.bf16.gmra.mxu0 %v933
        %v1013 = vpop.f32.mrf.mxu0
        %v1014 = vadd.f32 0.0, %v1013
        %v1015 = vpop.f32.mrf.mxu0
        %v1016 = vpop.f32.mrf.mxu0
        %v1017 = vadd.f32 0.0, %v1016
        %v1018 = vpop.f32.mrf.mxu0
        %1019 = vmatprep.mubr.bf16.mxu0 0
        %1020 = vmatmul.mubr.bf16.gmra.mxu0 %v936
        %v1021 = vpop.f32.mrf.mxu0
        %v1022 = vadd.f32 0.0, %v1021
        %v1023 = vpop.f32.mrf.mxu0
        %v1024 = vpop.f32.mrf.mxu0
        %v1025 = vadd.f32 0.0, %v1024
        %v1026 = vpop.f32.mrf.mxu0
        %1027 = vmatprep.mubr.bf16.mxu0 0
        %1028 = vmatmul.mubr.bf16.gmra.mxu0 %v939
        %v1029 = vpop.f32.mrf.mxu0
        %v1030 = vadd.f32 0.0, %v1029
        %v1031 = vpop.f32.mrf.mxu0
        %v1032 = vpop.f32.mrf.mxu0
        %v1033 = vadd.f32 0.0, %v1032
        %v1034 = vpop.f32.mrf.mxu0
        %1035 = vmatprep.mubr.bf16.mxu0 0
        %1036 = vmatmul.mubr.bf16.gmra.mxu0 %v942
        %v1037 = vpop.f32.mrf.mxu0
        %v1038 = vadd.f32 0.0, %v1037
        %v1039 = vpop.f32.mrf.mxu0
        %v1040 = vpop.f32.mrf.mxu0
        %v1041 = vadd.f32 0.0, %v1040
        %v1042 = vpop.f32.mrf.mxu0
        %1043 = vdwg.mxu0
        %v1044 = vadd.f32 %v767, %v982
        %v1045 = vadd.f32 %v770, %v985
        %v1046 = vadd.f32 %v775, %v990
        %v1047 = vadd.f32 %v778, %v993
        %v1048 = vadd.f32 %v783, %v998
        %v1049 = vadd.f32 %v786, %v1001
        %v1050 = vadd.f32 %v791, %v1006
        %v1051 = vadd.f32 %v794, %v1009
        %v1052 = vadd.f32 %v799, %v1014
        %v1053 = vadd.f32 %v802, %v1017
        %v1054 = vadd.f32 %v807, %v1022
        %v1055 = vadd.f32 %v810, %v1025
        %v1056 = vadd.f32 %v815, %v1030
        %v1057 = vadd.f32 %v818, %v1033
        %v1058 = vadd.f32 %v823, %v1038
        %v1059 = vadd.f32 %v826, %v1041
        %v1062 = vunpack.c.l.b16 %v305
        %v1063 = vunpack.c.l.b16 %v306
        %v1064 = vpack.c.b16 %v1063, %v1062
        %v1066 = vsel %vm539, %v1064, 0
        %v1069 = vsel %vm564, %v314, 0
        %1071 = vmatprep.subr.bf16.mxu0 0
        %1072 = vmatpush1.bf16.msra.mxu0 0
        %1073 = vmatprep.subr.bf16.mxu0 0
        %1074 = vmatpush1.bf16.msra.mxu0 0
        %1075 = vmatprep.subr.bf16.mxu0 0
        %1076 = vmatpush1.bf16.msra.mxu0 0
        %1077 = vmatprep.subr.bf16.mxu0 0
        %1078 = vmatpush1.bf16.msra.mxu0 0
        %1079 = vmatprep.subr.bf16.mxu0 0
        %1080 = vmatpush1.bf16.msra.mxu0 0
        %1081 = vmatprep.subr.bf16.mxu0 0
        %1082 = vmatpush1.bf16.msra.mxu0 0
        %1083 = vmatprep.subr.bf16.mxu0 0
        %1084 = vmatpush1.bf16.msra.mxu0 0
        %1085 = vmatprep.subr.bf16.mxu0 0
        %1086 = vmatpush1.bf16.msra.mxu0 %v1069
        %1087 = vmatprep.subr.bf16.mxu0 0
        %1088 = vmatpush2.bf16.msra.mxu0 0
        %1089 = vmatprep.subr.bf16.mxu0 0
        %1090 = vmatpush2.bf16.msra.mxu0 0
        %1091 = vmatprep.subr.bf16.mxu0 0
        %1092 = vmatpush2.bf16.msra.mxu0 0
        %1093 = vmatprep.subr.bf16.mxu0 0
        %1094 = vmatpush2.bf16.msra.mxu0 0
        %1095 = vmatprep.subr.bf16.mxu0 0
        %1096 = vmatpush2.bf16.msra.mxu0 0
        %1097 = vmatprep.subr.bf16.mxu0 0
        %1098 = vmatpush2.bf16.msra.mxu0 0
        %1099 = vmatprep.subr.bf16.mxu0 0
        %1100 = vmatpush2.bf16.msra.mxu0 0
        %1101 = vmatprep.subr.bf16.mxu0 0
        %1102 = vmatpush2.bf16.msra.mxu0 0
        %1103 = vmatprep.mubr.bf16.mxu0 0
        %1104 = vmatmul.mubr.bf16.gmra.mxu0 %v709
        %v1105 = vpop.f32.mrf.mxu0
        %v1106 = vadd.f32 0.0, %v1105
        %v1107 = vpop.f32.mrf.mxu0
        %v1108 = vpop.f32.mrf.mxu0
        %v1109 = vadd.f32 0.0, %v1108
        %v1110 = vpop.f32.mrf.mxu0
        %1111 = vmatprep.mubr.bf16.mxu0 0
        %1112 = vmatmul.mubr.bf16.gmra.mxu0 %v712
        %v1113 = vpop.f32.mrf.mxu0
        %v1114 = vadd.f32 0.0, %v1113
        %v1115 = vpop.f32.mrf.mxu0
        %v1116 = vpop.f32.mrf.mxu0
        %v1117 = vadd.f32 0.0, %v1116
        %v1118 = vpop.f32.mrf.mxu0
        %1119 = vmatprep.mubr.bf16.mxu0 0
        %1120 = vmatmul.mubr.bf16.gmra.mxu0 %v715
        %v1121 = vpop.f32.mrf.mxu0
        %v1122 = vadd.f32 0.0, %v1121
        %v1123 = vpop.f32.mrf.mxu0
        %v1124 = vpop.f32.mrf.mxu0
        %v1125 = vadd.f32 0.0, %v1124
        %v1126 = vpop.f32.mrf.mxu0
        %1127 = vmatprep.mubr.bf16.mxu0 0
        %1128 = vmatmul.mubr.bf16.gmra.mxu0 %v718
        %v1129 = vpop.f32.mrf.mxu0
        %v1130 = vadd.f32 0.0, %v1129
        %v1131 = vpop.f32.mrf.mxu0
        %v1132 = vpop.f32.mrf.mxu0
        %v1133 = vadd.f32 0.0, %v1132
        %v1134 = vpop.f32.mrf.mxu0
        %1135 = vmatprep.mubr.bf16.mxu0 0
        %1136 = vmatmul.mubr.bf16.gmra.mxu0 %v721
        %v1137 = vpop.f32.mrf.mxu0
        %v1138 = vadd.f32 0.0, %v1137
        %v1139 = vpop.f32.mrf.mxu0
        %v1140 = vpop.f32.mrf.mxu0
        %v1141 = vadd.f32 0.0, %v1140
        %v1142 = vpop.f32.mrf.mxu0
        %1143 = vmatprep.mubr.bf16.mxu0 0
        %1144 = vmatmul.mubr.bf16.gmra.mxu0 %v724
        %v1145 = vpop.f32.mrf.mxu0
        %v1146 = vadd.f32 0.0, %v1145
        %v1147 = vpop.f32.mrf.mxu0
        %v1148 = vpop.f32.mrf.mxu0
        %v1149 = vadd.f32 0.0, %v1148
        %v1150 = vpop.f32.mrf.mxu0
        %1151 = vmatprep.mubr.bf16.mxu0 0
        %1152 = vmatmul.mubr.bf16.gmra.mxu0 %v727
        %v1153 = vpop.f32.mrf.mxu0
        %v1154 = vadd.f32 0.0, %v1153
        %v1155 = vpop.f32.mrf.mxu0
        %v1156 = vpop.f32.mrf.mxu0
        %v1157 = vadd.f32 0.0, %v1156
        %v1158 = vpop.f32.mrf.mxu0
        %1159 = vmatprep.mubr.bf16.mxu0 0
        %1160 = vmatmul.mubr.bf16.gmra.mxu0 %v1066
        %v1161 = vpop.f32.mrf.mxu0
        %v1162 = vadd.f32 0.0, %v1161
        %v1163 = vpop.f32.mrf.mxu0
        %v1164 = vpop.f32.mrf.mxu0
        %v1165 = vadd.f32 0.0, %v1164
        %v1166 = vpop.f32.mrf.mxu0
        %1167 = vdwg.mxu0
        %v1168 = vadd.f32 %v1044, %v1106
        %v1169 = vadd.f32 %v1045, %v1109
        %v1170 = vadd.f32 %v1046, %v1114
        %v1171 = vadd.f32 %v1047, %v1117
        %v1172 = vadd.f32 %v1048, %v1122
        %v1173 = vadd.f32 %v1049, %v1125
        %v1174 = vadd.f32 %v1050, %v1130
        %v1175 = vadd.f32 %v1051, %v1133
        %v1176 = vadd.f32 %v1052, %v1138
        %v1177 = vadd.f32 %v1053, %v1141
        %v1178 = vadd.f32 %v1054, %v1146
        %v1179 = vadd.f32 %v1055, %v1149
        %v1180 = vadd.f32 %v1056, %v1154
        %v1181 = vadd.f32 %v1057, %v1157
        %v1182 = vadd.f32 %v1058, %v1162
        %v1183 = vadd.f32 %v1059, %v1165
        %v1185 = vshrl.u32 %v305, 16
        %v1187 = vrot.slane %v1185, 4
        %v1188 = vshll.u32 %v305, 16
        %v1190 = vrot.slane %v1188, 5
        %v1191 = vor.u32 %v1187, %v1190
        %v1192 = vrot.slane %v1191, 4
        %v1194 = vshll.u32 %v306, 16
        %v1196 = vrot.slane %v1194, 5
        %v1197 = vsel %vm322, %v1192, %v1196
        %v1198 = vshrl.u32 %v306, 16
        %v1200 = vrot.slane %v1198, 4
        %v1201 = vor.u32 %v1200, %v1196
        %v1202 = vrot.slane %v1201, 4
        %v1204 = vshll.u32 %v307, 16
        %v1206 = vrot.slane %v1204, 5
        %v1207 = vsel %vm322, %v1202, %v1206
        %v1208 = vunpack.c.l.b16 %v1197
        %v1209 = vunpack.c.l.b16 %v1207
        %v1210 = vpack.c.b16 %v1209, %v1208
        %v1212 = vsel %vm539, %v1210, 0
        %v1215 = vsel %vm564, %v315, 0
        %1217 = vmatprep.subr.bf16.mxu0 0
        %1218 = vmatpush1.bf16.msra.mxu0 0
        %1219 = vmatprep.subr.bf16.mxu0 0
        %1220 = vmatpush1.bf16.msra.mxu0 0
        %1221 = vmatprep.subr.bf16.mxu0 0
        %1222 = vmatpush1.bf16.msra.mxu0 0
        %1223 = vmatprep.subr.bf16.mxu0 0
        %1224 = vmatpush1.bf16.msra.mxu0 0
        %1225 = vmatprep.subr.bf16.mxu0 0
        %1226 = vmatpush1.bf16.msra.mxu0 0
        %1227 = vmatprep.subr.bf16.mxu0 0
        %1228 = vmatpush1.bf16.msra.mxu0 0
        %1229 = vmatprep.subr.bf16.mxu0 0
        %1230 = vmatpush1.bf16.msra.mxu0 0
        %1231 = vmatprep.subr.bf16.mxu0 0
        %1232 = vmatpush1.bf16.msra.mxu0 %v1215
        %1233 = vmatprep.subr.bf16.mxu0 0
        %1234 = vmatpush2.bf16.msra.mxu0 0
        %1235 = vmatprep.subr.bf16.mxu0 0
        %1236 = vmatpush2.bf16.msra.mxu0 0
        %1237 = vmatprep.subr.bf16.mxu0 0
        %1238 = vmatpush2.bf16.msra.mxu0 0
        %1239 = vmatprep.subr.bf16.mxu0 0
        %1240 = vmatpush2.bf16.msra.mxu0 0
        %1241 = vmatprep.subr.bf16.mxu0 0
        %1242 = vmatpush2.bf16.msra.mxu0 0
        %1243 = vmatprep.subr.bf16.mxu0 0
        %1244 = vmatpush2.bf16.msra.mxu0 0
        %1245 = vmatprep.subr.bf16.mxu0 0
        %1246 = vmatpush2.bf16.msra.mxu0 0
        %1247 = vmatprep.subr.bf16.mxu0 0
        %1248 = vmatpush2.bf16.msra.mxu0 0
        %1249 = vmatprep.mubr.bf16.mxu0 0
        %1250 = vmatmul.mubr.bf16.gmra.mxu0 %v544
        %v1251 = vpop.f32.mrf.mxu0
        %v1252 = vadd.f32 0.0, %v1251
        %v1253 = vpop.f32.mrf.mxu0
        %v1254 = vpop.f32.mrf.mxu0
        %v1255 = vadd.f32 0.0, %v1254
        %v1256 = vpop.f32.mrf.mxu0
        %1257 = vmatprep.mubr.bf16.mxu0 0
        %1258 = vmatmul.mubr.bf16.gmra.mxu0 %v547
        %v1259 = vpop.f32.mrf.mxu0
        %v1260 = vadd.f32 0.0, %v1259
        %v1261 = vpop.f32.mrf.mxu0
        %v1262 = vpop.f32.mrf.mxu0
        %v1263 = vadd.f32 0.0, %v1262
        %v1264 = vpop.f32.mrf.mxu0
        %1265 = vmatprep.mubr.bf16.mxu0 0
        %1266 = vmatmul.mubr.bf16.gmra.mxu0 %v550
        %v1267 = vpop.f32.mrf.mxu0
        %v1268 = vadd.f32 0.0, %v1267
        %v1269 = vpop.f32.mrf.mxu0
        %v1270 = vpop.f32.mrf.mxu0
        %v1271 = vadd.f32 0.0, %v1270
        %v1272 = vpop.f32.mrf.mxu0
        %1273 = vmatprep.mubr.bf16.mxu0 0
        %1274 = vmatmul.mubr.bf16.gmra.mxu0 %v553
        %v1275 = vpop.f32.mrf.mxu0
        %v1276 = vadd.f32 0.0, %v1275
        %v1277 = vpop.f32.mrf.mxu0
        %v1278 = vpop.f32.mrf.mxu0
        %v1279 = vadd.f32 0.0, %v1278
        %v1280 = vpop.f32.mrf.mxu0
        %1281 = vmatprep.mubr.bf16.mxu0 0
        %1282 = vmatmul.mubr.bf16.gmra.mxu0 %v556
        %v1283 = vpop.f32.mrf.mxu0
        %v1284 = vadd.f32 0.0, %v1283
        %v1285 = vpop.f32.mrf.mxu0
        %v1286 = vpop.f32.mrf.mxu0
        %v1287 = vadd.f32 0.0, %v1286
        %v1288 = vpop.f32.mrf.mxu0
        %1289 = vmatprep.mubr.bf16.mxu0 0
        %1290 = vmatmul.mubr.bf16.gmra.mxu0 %v559
        %v1291 = vpop.f32.mrf.mxu0
        %v1292 = vadd.f32 0.0, %v1291
        %v1293 = vpop.f32.mrf.mxu0
        %v1294 = vpop.f32.mrf.mxu0
        %v1295 = vadd.f32 0.0, %v1294
        %v1296 = vpop.f32.mrf.mxu0
        %1297 = vmatprep.mubr.bf16.mxu0 0
        %1298 = vmatmul.mubr.bf16.gmra.mxu0 %v562
        %v1299 = vpop.f32.mrf.mxu0
        %v1300 = vadd.f32 0.0, %v1299
        %v1301 = vpop.f32.mrf.mxu0
        %v1302 = vpop.f32.mrf.mxu0
        %v1303 = vadd.f32 0.0, %v1302
        %v1304 = vpop.f32.mrf.mxu0
        %1305 = vmatprep.mubr.bf16.mxu0 0
        %1306 = vmatmul.mubr.bf16.gmra.mxu0 %v1212
        %v1307 = vpop.f32.mrf.mxu0
        %v1308 = vadd.f32 0.0, %v1307
        %v1309 = vpop.f32.mrf.mxu0
        %v1310 = vpop.f32.mrf.mxu0
        %v1311 = vadd.f32 0.0, %v1310
        %v1312 = vpop.f32.mrf.mxu0
        %1313 = vdwg.mxu0
        %v1314 = vadd.f32 %v1168, %v1252
        %v1315 = vadd.f32 %v1169, %v1255
        %v1316 = vadd.f32 %v1170, %v1260
        %v1317 = vadd.f32 %v1171, %v1263
        %v1318 = vadd.f32 %v1172, %v1268
        %v1319 = vadd.f32 %v1173, %v1271
        %v1320 = vadd.f32 %v1174, %v1276
        %v1321 = vadd.f32 %v1175, %v1279
        %v1322 = vadd.f32 %v1176, %v1284
        %v1323 = vadd.f32 %v1177, %v1287
        %v1324 = vadd.f32 %v1178, %v1292
        %v1325 = vadd.f32 %v1179, %v1295
        %v1326 = vadd.f32 %v1180, %v1300
        %v1327 = vadd.f32 %v1181, %v1303
        %v1328 = vadd.f32 %v1182, %v1308
        %v1329 = vadd.f32 %v1183, %v1311
        %v1331 = vrot.slane %v305, 5
        %v1332 = vrot.slane %v1331, 4
        %v1333 = vrot.slane %v306, 5
        %v1334 = vsel %vm839, %v1332, %v1333
        %v1335 = vrot.slane %v1333, 4
        %v1336 = vrot.slane %v307, 5
        %v1337 = vsel %vm839, %v1335, %v1336
        %v1338 = vunpack.c.l.b16 %v1334
        %v1339 = vunpack.c.l.b16 %v1337
        %v1340 = vpack.c.b16 %v1339, %v1338
        %v1342 = vsel %vm539, %v1340, 0
        %v1345 = vsel %vm564, %v316, 0
        %1347 = vmatprep.subr.bf16.mxu0 0
        %1348 = vmatpush1.bf16.msra.mxu0 0
        %1349 = vmatprep.subr.bf16.mxu0 0
        %1350 = vmatpush1.bf16.msra.mxu0 0
        %1351 = vmatprep.subr.bf16.mxu0 0
        %1352 = vmatpush1.bf16.msra.mxu0 0
        %1353 = vmatprep.subr.bf16.mxu0 0
        %1354 = vmatpush1.bf16.msra.mxu0 0
        %1355 = vmatprep.subr.bf16.mxu0 0
        %1356 = vmatpush1.bf16.msra.mxu0 0
        %1357 = vmatprep.subr.bf16.mxu0 0
        %1358 = vmatpush1.bf16.msra.mxu0 0
        %1359 = vmatprep.subr.bf16.mxu0 0
        %1360 = vmatpush1.bf16.msra.mxu0 0
        %1361 = vmatprep.subr.bf16.mxu0 0
        %1362 = vmatpush1.bf16.msra.mxu0 %v1345
        %1363 = vmatprep.subr.bf16.mxu0 0
        %1364 = vmatpush2.bf16.msra.mxu0 0
        %1365 = vmatprep.subr.bf16.mxu0 0
        %1366 = vmatpush2.bf16.msra.mxu0 0
        %1367 = vmatprep.subr.bf16.mxu0 0
        %1368 = vmatpush2.bf16.msra.mxu0 0
        %1369 = vmatprep.subr.bf16.mxu0 0
        %1370 = vmatpush2.bf16.msra.mxu0 0
        %1371 = vmatprep.subr.bf16.mxu0 0
        %1372 = vmatpush2.bf16.msra.mxu0 0
        %1373 = vmatprep.subr.bf16.mxu0 0
        %1374 = vmatpush2.bf16.msra.mxu0 0
        %1375 = vmatprep.subr.bf16.mxu0 0
        %1376 = vmatpush2.bf16.msra.mxu0 0
        %1377 = vmatprep.subr.bf16.mxu0 0
        %1378 = vmatpush2.bf16.msra.mxu0 0
        %1379 = vmatprep.mubr.bf16.mxu0 0
        %1380 = vmatmul.mubr.bf16.gmra.mxu0 %v924
        %v1381 = vpop.f32.mrf.mxu0
        %v1382 = vadd.f32 0.0, %v1381
        %v1383 = vpop.f32.mrf.mxu0
        %v1384 = vpop.f32.mrf.mxu0
        %v1385 = vadd.f32 0.0, %v1384
        %v1386 = vpop.f32.mrf.mxu0
        %1387 = vmatprep.mubr.bf16.mxu0 0
        %1388 = vmatmul.mubr.bf16.gmra.mxu0 %v927
        %v1389 = vpop.f32.mrf.mxu0
        %v1390 = vadd.f32 0.0, %v1389
        %v1391 = vpop.f32.mrf.mxu0
        %v1392 = vpop.f32.mrf.mxu0
        %v1393 = vadd.f32 0.0, %v1392
        %v1394 = vpop.f32.mrf.mxu0
        %1395 = vmatprep.mubr.bf16.mxu0 0
        %1396 = vmatmul.mubr.bf16.gmra.mxu0 %v930
        %v1397 = vpop.f32.mrf.mxu0
        %v1398 = vadd.f32 0.0, %v1397
        %v1399 = vpop.f32.mrf.mxu0
        %v1400 = vpop.f32.mrf.mxu0
        %v1401 = vadd.f32 0.0, %v1400
        %v1402 = vpop.f32.mrf.mxu0
        %1403 = vmatprep.mubr.bf16.mxu0 0
        %1404 = vmatmul.mubr.bf16.gmra.mxu0 %v933
        %v1405 = vpop.f32.mrf.mxu0
        %v1406 = vadd.f32 0.0, %v1405
        %v1407 = vpop.f32.mrf.mxu0
        %v1408 = vpop.f32.mrf.mxu0
        %v1409 = vadd.f32 0.0, %v1408
        %v1410 = vpop.f32.mrf.mxu0
        %1411 = vmatprep.mubr.bf16.mxu0 0
        %1412 = vmatmul.mubr.bf16.gmra.mxu0 %v936
        %v1413 = vpop.f32.mrf.mxu0
        %v1414 = vadd.f32 0.0, %v1413
        %v1415 = vpop.f32.mrf.mxu0
        %v1416 = vpop.f32.mrf.mxu0
        %v1417 = vadd.f32 0.0, %v1416
        %v1418 = vpop.f32.mrf.mxu0
        %1419 = vmatprep.mubr.bf16.mxu0 0
        %1420 = vmatmul.mubr.bf16.gmra.mxu0 %v939
        %v1421 = vpop.f32.mrf.mxu0
        %v1422 = vadd.f32 0.0, %v1421
        %v1423 = vpop.f32.mrf.mxu0
        %v1424 = vpop.f32.mrf.mxu0
        %v1425 = vadd.f32 0.0, %v1424
        %v1426 = vpop.f32.mrf.mxu0
        %1427 = vmatprep.mubr.bf16.mxu0 0
        %1428 = vmatmul.mubr.bf16.gmra.mxu0 %v942
        %v1429 = vpop.f32.mrf.mxu0
        %v1430 = vadd.f32 0.0, %v1429
        %v1431 = vpop.f32.mrf.mxu0
        %v1432 = vpop.f32.mrf.mxu0
        %v1433 = vadd.f32 0.0, %v1432
        %v1434 = vpop.f32.mrf.mxu0
        %1435 = vmatprep.mubr.bf16.mxu0 0
        %1436 = vmatmul.mubr.bf16.gmra.mxu0 %v1342
        %v1437 = vpop.f32.mrf.mxu0
        %v1438 = vadd.f32 0.0, %v1437
        %v1439 = vpop.f32.mrf.mxu0
        %v1440 = vpop.f32.mrf.mxu0
        %v1441 = vadd.f32 0.0, %v1440
        %v1442 = vpop.f32.mrf.mxu0
        %1443 = vdwg.mxu0
        %v1444 = vadd.f32 %v1314, %v1382
        %v1445 = vadd.f32 %v1315, %v1385
        %v1446 = vadd.f32 %v1316, %v1390
        %v1447 = vadd.f32 %v1317, %v1393
        %v1448 = vadd.f32 %v1318, %v1398
        %v1449 = vadd.f32 %v1319, %v1401
        %v1450 = vadd.f32 %v1320, %v1406
        %v1451 = vadd.f32 %v1321, %v1409
        %v1452 = vadd.f32 %v1322, %v1414
        %v1453 = vadd.f32 %v1323, %v1417
        %v1454 = vadd.f32 %v1324, %v1422
        %v1455 = vadd.f32 %v1325, %v1425
        %v1456 = vadd.f32 %v1326, %v1430
        %v1457 = vadd.f32 %v1327, %v1433
        %v1458 = vadd.f32 %v1328, %v1438
        %v1459 = vadd.f32 %v1329, %v1441
        %v1462 = vunpack.c.l.b16 %v308
        %v1463 = vunpack.c.l.b16 %v309
        %v1464 = vpack.c.b16 %v1463, %v1462
        %v1466 = vsel %vm539, %v1464, 0
        %v1469 = vsel %vm564, %v317, 0
        %1471 = vmatprep.subr.bf16.mxu0 0
        %1472 = vmatpush1.bf16.msra.mxu0 0
        %1473 = vmatprep.subr.bf16.mxu0 0
        %1474 = vmatpush1.bf16.msra.mxu0 0
        %1475 = vmatprep.subr.bf16.mxu0 0
        %1476 = vmatpush1.bf16.msra.mxu0 0
        %1477 = vmatprep.subr.bf16.mxu0 0
        %1478 = vmatpush1.bf16.msra.mxu0 0
        %1479 = vmatprep.subr.bf16.mxu0 0
        %1480 = vmatpush1.bf16.msra.mxu0 0
        %1481 = vmatprep.subr.bf16.mxu0 0
        %1482 = vmatpush1.bf16.msra.mxu0 0
        %1483 = vmatprep.subr.bf16.mxu0 0
        %1484 = vmatpush1.bf16.msra.mxu0 0
        %1485 = vmatprep.subr.bf16.mxu0 0
        %1486 = vmatpush1.bf16.msra.mxu0 %v1469
        %1487 = vmatprep.subr.bf16.mxu0 0
        %1488 = vmatpush2.bf16.msra.mxu0 0
        %1489 = vmatprep.subr.bf16.mxu0 0
        %1490 = vmatpush2.bf16.msra.mxu0 0
        %1491 = vmatprep.subr.bf16.mxu0 0
        %1492 = vmatpush2.bf16.msra.mxu0 0
        %1493 = vmatprep.subr.bf16.mxu0 0
        %1494 = vmatpush2.bf16.msra.mxu0 0
        %1495 = vmatprep.subr.bf16.mxu0 0
        %1496 = vmatpush2.bf16.msra.mxu0 0
        %1497 = vmatprep.subr.bf16.mxu0 0
        %1498 = vmatpush2.bf16.msra.mxu0 0
        %1499 = vmatprep.subr.bf16.mxu0 0
        %1500 = vmatpush2.bf16.msra.mxu0 0
        %1501 = vmatprep.subr.bf16.mxu0 0
        %1502 = vmatpush2.bf16.msra.mxu0 0
        %1503 = vmatprep.mubr.bf16.mxu0 0
        %1504 = vmatmul.mubr.bf16.gmra.mxu0 %v712
        %v1505 = vpop.f32.mrf.mxu0
        %v1506 = vadd.f32 0.0, %v1505
        %v1507 = vpop.f32.mrf.mxu0
        %v1508 = vpop.f32.mrf.mxu0
        %v1509 = vadd.f32 0.0, %v1508
        %v1510 = vpop.f32.mrf.mxu0
        %1511 = vmatprep.mubr.bf16.mxu0 0
        %1512 = vmatmul.mubr.bf16.gmra.mxu0 %v715
        %v1513 = vpop.f32.mrf.mxu0
        %v1514 = vadd.f32 0.0, %v1513
        %v1515 = vpop.f32.mrf.mxu0
        %v1516 = vpop.f32.mrf.mxu0
        %v1517 = vadd.f32 0.0, %v1516
        %v1518 = vpop.f32.mrf.mxu0
        %1519 = vmatprep.mubr.bf16.mxu0 0
        %1520 = vmatmul.mubr.bf16.gmra.mxu0 %v718
        %v1521 = vpop.f32.mrf.mxu0
        %v1522 = vadd.f32 0.0, %v1521
        %v1523 = vpop.f32.mrf.mxu0
        %v1524 = vpop.f32.mrf.mxu0
        %v1525 = vadd.f32 0.0, %v1524
        %v1526 = vpop.f32.mrf.mxu0
        %1527 = vmatprep.mubr.bf16.mxu0 0
        %1528 = vmatmul.mubr.bf16.gmra.mxu0 %v721
        %v1529 = vpop.f32.mrf.mxu0
        %v1530 = vadd.f32 0.0, %v1529
        %v1531 = vpop.f32.mrf.mxu0
        %v1532 = vpop.f32.mrf.mxu0
        %v1533 = vadd.f32 0.0, %v1532
        %v1534 = vpop.f32.mrf.mxu0
        %1535 = vmatprep.mubr.bf16.mxu0 0
        %1536 = vmatmul.mubr.bf16.gmra.mxu0 %v724
        %v1537 = vpop.f32.mrf.mxu0
        %v1538 = vadd.f32 0.0, %v1537
        %v1539 = vpop.f32.mrf.mxu0
        %v1540 = vpop.f32.mrf.mxu0
        %v1541 = vadd.f32 0.0, %v1540
        %v1542 = vpop.f32.mrf.mxu0
        %1543 = vmatprep.mubr.bf16.mxu0 0
        %1544 = vmatmul.mubr.bf16.gmra.mxu0 %v727
        %v1545 = vpop.f32.mrf.mxu0
        %v1546 = vadd.f32 0.0, %v1545
        %v1547 = vpop.f32.mrf.mxu0
        %v1548 = vpop.f32.mrf.mxu0
        %v1549 = vadd.f32 0.0, %v1548
        %v1550 = vpop.f32.mrf.mxu0
        %1551 = vmatprep.mubr.bf16.mxu0 0
        %1552 = vmatmul.mubr.bf16.gmra.mxu0 %v1066
        %v1553 = vpop.f32.mrf.mxu0
        %v1554 = vadd.f32 0.0, %v1553
        %v1555 = vpop.f32.mrf.mxu0
        %v1556 = vpop.f32.mrf.mxu0
        %v1557 = vadd.f32 0.0, %v1556
        %v1558 = vpop.f32.mrf.mxu0
        %1559 = vmatprep.mubr.bf16.mxu0 0
        %1560 = vmatmul.mubr.bf16.gmra.mxu0 %v1466
        %v1561 = vpop.f32.mrf.mxu0
        %v1562 = vadd.f32 0.0, %v1561
        %v1563 = vpop.f32.mrf.mxu0
        %v1564 = vpop.f32.mrf.mxu0
        %v1565 = vadd.f32 0.0, %v1564
        %v1566 = vpop.f32.mrf.mxu0
        %1567 = vdwg.mxu0
        %v1568 = vadd.f32 %v1444, %v1506
        %v1569 = vadd.f32 %v1445, %v1509
        %v1570 = vadd.f32 %v1446, %v1514
        %v1571 = vadd.f32 %v1447, %v1517
        %v1572 = vadd.f32 %v1448, %v1522
        %v1573 = vadd.f32 %v1449, %v1525
        %v1574 = vadd.f32 %v1450, %v1530
        %v1575 = vadd.f32 %v1451, %v1533
        %v1576 = vadd.f32 %v1452, %v1538
        %v1577 = vadd.f32 %v1453, %v1541
        %v1578 = vadd.f32 %v1454, %v1546
        %v1579 = vadd.f32 %v1455, %v1549
        %v1580 = vadd.f32 %v1456, %v1554
        %v1581 = vadd.f32 %v1457, %v1557
        %v1582 = vadd.f32 %v1458, %v1562
        %v1583 = vadd.f32 %v1459, %v1565
        %v1585 = vshrl.u32 %v308, 16
        %v1587 = vrot.slane %v1585, 4
        %v1588 = vshll.u32 %v308, 16
        %v1590 = vrot.slane %v1588, 5
        %v1591 = vor.u32 %v1587, %v1590
        %v1592 = vrot.slane %v1591, 4
        %v1594 = vshll.u32 %v309, 16
        %v1596 = vrot.slane %v1594, 5
        %v1597 = vsel %vm322, %v1592, %v1596
        %v1598 = vshrl.u32 %v309, 16
        %v1600 = vrot.slane %v1598, 4
        %v1601 = vor.u32 %v1600, %v1596
        %v1602 = vrot.slane %v1601, 4
        %v1604 = vshll.u32 %v310, 16
        %v1606 = vrot.slane %v1604, 5
        %v1607 = vsel %vm322, %v1602, %v1606
        %v1608 = vunpack.c.l.b16 %v1597
        %v1609 = vunpack.c.l.b16 %v1607
        %v1610 = vpack.c.b16 %v1609, %v1608
        %v1612 = vsel %vm539, %v1610, 0
        %v1615 = vsel %vm564, %v318, 0
        %1617 = vmatprep.subr.bf16.mxu0 0
        %1618 = vmatpush1.bf16.msra.mxu0 0
        %1619 = vmatprep.subr.bf16.mxu0 0
        %1620 = vmatpush1.bf16.msra.mxu0 0
        %1621 = vmatprep.subr.bf16.mxu0 0
        %1622 = vmatpush1.bf16.msra.mxu0 0
        %1623 = vmatprep.subr.bf16.mxu0 0
        %1624 = vmatpush1.bf16.msra.mxu0 0
        %1625 = vmatprep.subr.bf16.mxu0 0
        %1626 = vmatpush1.bf16.msra.mxu0 0
        %1627 = vmatprep.subr.bf16.mxu0 0
        %1628 = vmatpush1.bf16.msra.mxu0 0
        %1629 = vmatprep.subr.bf16.mxu0 0
        %1630 = vmatpush1.bf16.msra.mxu0 0
        %1631 = vmatprep.subr.bf16.mxu0 0
        %1632 = vmatpush1.bf16.msra.mxu0 %v1615
        %1633 = vmatprep.subr.bf16.mxu0 0
        %1634 = vmatpush2.bf16.msra.mxu0 0
        %1635 = vmatprep.subr.bf16.mxu0 0
        %1636 = vmatpush2.bf16.msra.mxu0 0
        %1637 = vmatprep.subr.bf16.mxu0 0
        %1638 = vmatpush2.bf16.msra.mxu0 0
        %1639 = vmatprep.subr.bf16.mxu0 0
        %1640 = vmatpush2.bf16.msra.mxu0 0
        %1641 = vmatprep.subr.bf16.mxu0 0
        %1642 = vmatpush2.bf16.msra.mxu0 0
        %1643 = vmatprep.subr.bf16.mxu0 0
        %1644 = vmatpush2.bf16.msra.mxu0 0
        %1645 = vmatprep.subr.bf16.mxu0 0
        %1646 = vmatpush2.bf16.msra.mxu0 0
        %1647 = vmatprep.subr.bf16.mxu0 0
        %1648 = vmatpush2.bf16.msra.mxu0 0
        %1649 = vmatprep.mubr.bf16.mxu0 0
        %1650 = vmatmul.mubr.bf16.gmra.mxu0 %v547
        %v1651 = vpop.f32.mrf.mxu0
        %v1652 = vadd.f32 0.0, %v1651
        %v1653 = vpop.f32.mrf.mxu0
        %v1654 = vpop.f32.mrf.mxu0
        %v1655 = vadd.f32 0.0, %v1654
        %v1656 = vpop.f32.mrf.mxu0
        %1657 = vmatprep.mubr.bf16.mxu0 0
        %1658 = vmatmul.mubr.bf16.gmra.mxu0 %v550
        %v1659 = vpop.f32.mrf.mxu0
        %v1660 = vadd.f32 0.0, %v1659
        %v1661 = vpop.f32.mrf.mxu0
        %v1662 = vpop.f32.mrf.mxu0
        %v1663 = vadd.f32 0.0, %v1662
        %v1664 = vpop.f32.mrf.mxu0
        %1665 = vmatprep.mubr.bf16.mxu0 0
        %1666 = vmatmul.mubr.bf16.gmra.mxu0 %v553
        %v1667 = vpop.f32.mrf.mxu0
        %v1668 = vadd.f32 0.0, %v1667
        %v1669 = vpop.f32.mrf.mxu0
        %v1670 = vpop.f32.mrf.mxu0
        %v1671 = vadd.f32 0.0, %v1670
        %v1672 = vpop.f32.mrf.mxu0
        %1673 = vmatprep.mubr.bf16.mxu0 0
        %1674 = vmatmul.mubr.bf16.gmra.mxu0 %v556
        %v1675 = vpop.f32.mrf.mxu0
        %v1676 = vadd.f32 0.0, %v1675
        %v1677 = vpop.f32.mrf.mxu0
        %v1678 = vpop.f32.mrf.mxu0
        %v1679 = vadd.f32 0.0, %v1678
        %v1680 = vpop.f32.mrf.mxu0
        %1681 = vmatprep.mubr.bf16.mxu0 0
        %1682 = vmatmul.mubr.bf16.gmra.mxu0 %v559
        %v1683 = vpop.f32.mrf.mxu0
        %v1684 = vadd.f32 0.0, %v1683
        %v1685 = vpop.f32.mrf.mxu0
        %v1686 = vpop.f32.mrf.mxu0
        %v1687 = vadd.f32 0.0, %v1686
        %v1688 = vpop.f32.mrf.mxu0
        %1689 = vmatprep.mubr.bf16.mxu0 0
        %1690 = vmatmul.mubr.bf16.gmra.mxu0 %v562
        %v1691 = vpop.f32.mrf.mxu0
        %v1692 = vadd.f32 0.0, %v1691
        %v1693 = vpop.f32.mrf.mxu0
        %v1694 = vpop.f32.mrf.mxu0
        %v1695 = vadd.f32 0.0, %v1694
        %v1696 = vpop.f32.mrf.mxu0
        %1697 = vmatprep.mubr.bf16.mxu0 0
        %1698 = vmatmul.mubr.bf16.gmra.mxu0 %v1212
        %v1699 = vpop.f32.mrf.mxu0
        %v1700 = vadd.f32 0.0, %v1699
        %v1701 = vpop.f32.mrf.mxu0
        %v1702 = vpop.f32.mrf.mxu0
        %v1703 = vadd.f32 0.0, %v1702
        %v1704 = vpop.f32.mrf.mxu0
        %1705 = vmatprep.mubr.bf16.mxu0 0
        %1706 = vmatmul.mubr.bf16.gmra.mxu0 %v1612
        %v1707 = vpop.f32.mrf.mxu0
        %v1708 = vadd.f32 0.0, %v1707
        %v1709 = vpop.f32.mrf.mxu0
        %v1710 = vpop.f32.mrf.mxu0
        %v1711 = vadd.f32 0.0, %v1710
        %v1712 = vpop.f32.mrf.mxu0
        %1713 = vdwg.mxu0
        %v1714 = vadd.f32 %v1568, %v1652
        %v1715 = vadd.f32 %v1569, %v1655
        %v1716 = vadd.f32 %v1570, %v1660
        %v1717 = vadd.f32 %v1571, %v1663
        %v1718 = vadd.f32 %v1572, %v1668
        %v1719 = vadd.f32 %v1573, %v1671
        %v1720 = vadd.f32 %v1574, %v1676
        %v1721 = vadd.f32 %v1575, %v1679
        %v1722 = vadd.f32 %v1576, %v1684
        %v1723 = vadd.f32 %v1577, %v1687
        %v1724 = vadd.f32 %v1578, %v1692
        %v1725 = vadd.f32 %v1579, %v1695
        %v1726 = vadd.f32 %v1580, %v1700
        %v1727 = vadd.f32 %v1581, %v1703
        %v1728 = vadd.f32 %v1582, %v1708
        %v1729 = vadd.f32 %v1583, %v1711
        %v1731 = vrot.slane %v308, 5
        %v1732 = vrot.slane %v1731, 4
        %v1733 = vrot.slane %v309, 5
        %v1734 = vsel %vm839, %v1732, %v1733
        %v1735 = vrot.slane %v1733, 4
        %v1736 = vrot.slane %v310, 5
        %v1737 = vsel %vm839, %v1735, %v1736
        %v1738 = vunpack.c.l.b16 %v1734
        %v1739 = vunpack.c.l.b16 %v1737
        %v1740 = vpack.c.b16 %v1739, %v1738
        %v1742 = vsel %vm539, %v1740, 0
        %v1745 = vsel %vm564, %v319, 0
        %1747 = vmatprep.subr.bf16.mxu0 0
        %1748 = vmatpush1.bf16.msra.mxu0 0
        %1749 = vmatprep.subr.bf16.mxu0 0
        %1750 = vmatpush1.bf16.msra.mxu0 0
        %1751 = vmatprep.subr.bf16.mxu0 0
        %1752 = vmatpush1.bf16.msra.mxu0 0
        %1753 = vmatprep.subr.bf16.mxu0 0
        %1754 = vmatpush1.bf16.msra.mxu0 0
        %1755 = vmatprep.subr.bf16.mxu0 0
        %1756 = vmatpush1.bf16.msra.mxu0 0
        %1757 = vmatprep.subr.bf16.mxu0 0
        %1758 = vmatpush1.bf16.msra.mxu0 0
        %1759 = vmatprep.subr.bf16.mxu0 0
        %1760 = vmatpush1.bf16.msra.mxu0 0
        %1761 = vmatprep.subr.bf16.mxu0 0
        %1762 = vmatpush1.bf16.msra.mxu0 %v1745
        %1763 = vmatprep.subr.bf16.mxu0 0
        %1764 = vmatpush2.bf16.msra.mxu0 0
        %1765 = vmatprep.subr.bf16.mxu0 0
        %1766 = vmatpush2.bf16.msra.mxu0 0
        %1767 = vmatprep.subr.bf16.mxu0 0
        %1768 = vmatpush2.bf16.msra.mxu0 0
        %1769 = vmatprep.subr.bf16.mxu0 0
        %1770 = vmatpush2.bf16.msra.mxu0 0
        %1771 = vmatprep.subr.bf16.mxu0 0
        %1772 = vmatpush2.bf16.msra.mxu0 0
        %1773 = vmatprep.subr.bf16.mxu0 0
        %1774 = vmatpush2.bf16.msra.mxu0 0
        %1775 = vmatprep.subr.bf16.mxu0 0
        %1776 = vmatpush2.bf16.msra.mxu0 0
        %1777 = vmatprep.subr.bf16.mxu0 0
        %1778 = vmatpush2.bf16.msra.mxu0 0
        %1779 = vmatprep.mubr.bf16.mxu0 0
        %1780 = vmatmul.mubr.bf16.gmra.mxu0 %v927
        %v1781 = vpop.f32.mrf.mxu0
        %v1782 = vadd.f32 0.0, %v1781
        %v1783 = vpop.f32.mrf.mxu0
        %v1784 = vpop.f32.mrf.mxu0
        %v1785 = vadd.f32 0.0, %v1784
        %v1786 = vpop.f32.mrf.mxu0
        %1787 = vmatprep.mubr.bf16.mxu0 0
        %1788 = vmatmul.mubr.bf16.gmra.mxu0 %v930
        %v1789 = vpop.f32.mrf.mxu0
        %v1790 = vadd.f32 0.0, %v1789
        %v1791 = vpop.f32.mrf.mxu0
        %v1792 = vpop.f32.mrf.mxu0
        %v1793 = vadd.f32 0.0, %v1792
        %v1794 = vpop.f32.mrf.mxu0
        %1795 = vmatprep.mubr.bf16.mxu0 0
        %1796 = vmatmul.mubr.bf16.gmra.mxu0 %v933
        %v1797 = vpop.f32.mrf.mxu0
        %v1798 = vadd.f32 0.0, %v1797
        %v1799 = vpop.f32.mrf.mxu0
        %v1800 = vpop.f32.mrf.mxu0
        %v1801 = vadd.f32 0.0, %v1800
        %v1802 = vpop.f32.mrf.mxu0
        %1803 = vmatprep.mubr.bf16.mxu0 0
        %1804 = vmatmul.mubr.bf16.gmra.mxu0 %v936
        %v1805 = vpop.f32.mrf.mxu0
        %v1806 = vadd.f32 0.0, %v1805
        %v1807 = vpop.f32.mrf.mxu0
        %v1808 = vpop.f32.mrf.mxu0
        %v1809 = vadd.f32 0.0, %v1808
        %v1810 = vpop.f32.mrf.mxu0
        %1811 = vmatprep.mubr.bf16.mxu0 0
        %1812 = vmatmul.mubr.bf16.gmra.mxu0 %v939
        %v1813 = vpop.f32.mrf.mxu0
        %v1814 = vadd.f32 0.0, %v1813
        %v1815 = vpop.f32.mrf.mxu0
        %v1816 = vpop.f32.mrf.mxu0
        %v1817 = vadd.f32 0.0, %v1816
        %v1818 = vpop.f32.mrf.mxu0
        %1819 = vmatprep.mubr.bf16.mxu0 0
        %1820 = vmatmul.mubr.bf16.gmra.mxu0 %v942
        %v1821 = vpop.f32.mrf.mxu0
        %v1822 = vadd.f32 0.0, %v1821
        %v1823 = vpop.f32.mrf.mxu0
        %v1824 = vpop.f32.mrf.mxu0
        %v1825 = vadd.f32 0.0, %v1824
        %v1826 = vpop.f32.mrf.mxu0
        %1827 = vmatprep.mubr.bf16.mxu0 0
        %1828 = vmatmul.mubr.bf16.gmra.mxu0 %v1342
        %v1829 = vpop.f32.mrf.mxu0
        %v1830 = vadd.f32 0.0, %v1829
        %v1831 = vpop.f32.mrf.mxu0
        %v1832 = vpop.f32.mrf.mxu0
        %v1833 = vadd.f32 0.0, %v1832
        %v1834 = vpop.f32.mrf.mxu0
        %1835 = vmatprep.mubr.bf16.mxu0 0
        %1836 = vmatmul.mubr.bf16.gmra.mxu0 %v1742
        %v1837 = vpop.f32.mrf.mxu0
        %v1838 = vadd.f32 0.0, %v1837
        %v1839 = vpop.f32.mrf.mxu0
        %v1840 = vpop.f32.mrf.mxu0
        %v1841 = vadd.f32 0.0, %v1840
        %v1842 = vpop.f32.mrf.mxu0
        %1843 = vdwg.mxu0
        %v1844 = vadd.f32 %v1714, %v1782
        %v1845 = vadd.f32 %v1715, %v1785
        %v1846 = vadd.f32 %v1716, %v1790
        %v1847 = vadd.f32 %v1717, %v1793
        %v1848 = vadd.f32 %v1718, %v1798
        %v1849 = vadd.f32 %v1719, %v1801
        %v1850 = vadd.f32 %v1720, %v1806
        %v1851 = vadd.f32 %v1721, %v1809
        %v1852 = vadd.f32 %v1722, %v1814
        %v1853 = vadd.f32 %v1723, %v1817
        %v1854 = vadd.f32 %v1724, %v1822
        %v1855 = vadd.f32 %v1725, %v1825
        %v1856 = vadd.f32 %v1726, %v1830
        %v1857 = vadd.f32 %v1727, %v1833
        %v1858 = vadd.f32 %v1728, %v1838
        %v1859 = vadd.f32 %v1729, %v1841
        %v1860 = vmax.f32 %v1844, 0.0
        %v1861 = vmax.f32 %v1845, 0.0
        %v1862 = vmax.f32 %v1846, 0.0
        %v1863 = vmax.f32 %v1847, 0.0
        %v1864 = vmax.f32 %v1848, 0.0
        %v1865 = vmax.f32 %v1849, 0.0
        %v1866 = vmax.f32 %v1850, 0.0
        %v1867 = vmax.f32 %v1851, 0.0
        %v1868 = vmax.f32 %v1852, 0.0
        %v1869 = vmax.f32 %v1853, 0.0
        %v1870 = vmax.f32 %v1854, 0.0
        %v1871 = vmax.f32 %v1855, 0.0
        %v1872 = vmax.f32 %v1856, 0.0
        %v1873 = vmax.f32 %v1857, 0.0
        %v1874 = vmax.f32 %v1858, 0.0
        %v1875 = vmax.f32 %v1859, 0.0
        %v1876 = vld [vmem:[#allocation2] sm:$0x1]
        %v1877 = vadd.f32 %v1860, %v1861
        %v1878 = vadd.f32 %v1877, %v1862
        %v1879 = vadd.f32 %v1878, %v1863
        %v1880 = vadd.f32 %v1879, %v1864
        %v1881 = vadd.f32 %v1880, %v1865
        %v1882 = vadd.f32 %v1881, %v1866
        %v1883 = vadd.f32 %v1882, %v1867
        %v1884 = vadd.f32 %v1883, %v1868
        %v1885 = vadd.f32 %v1884, %v1869
        %v1886 = vadd.f32 %v1885, %v1870
        %v1887 = vadd.f32 %v1886, %v1871
        %v1888 = vadd.f32 %v1887, %v1872
        %v1889 = vadd.f32 %v1888, %v1873
        %v1890 = vadd.f32 %v1889, %v1874
        %v1891 = vadd.f32 %v1890, %v1875
        %v1892 = vrot.slane %v1891, 4
        %v1893 = vadd.f32 %v1891, %v1892
        %v1894 = vrot.slane %v1893, 2
        %v1895 = vadd.f32 %v1893, %v1894
        %v1896 = vrot.slane %v1895, 1
        %v1897 = vadd.f32 %v1895, %v1896
        %v1898 = vadd.f32 %v1876, %v1897
        %1899 = vst [vmem:[#allocation2] sm:$0x1] %v1898
        %p1900 = scmp.eq.s32.totalorder %s25, 1
        // Predicated region
        $region49: #{baseline_distortion_forward.1} parent=43 // pred_check
          %p1901 = pneg %p1900
        $region50: #{baseline_distortion_forward.1} parent=43 // pred_check_branch
          %1903 = sbr.rel (%p1901) target = $region52
        $region51: #{baseline_distortion_forward.1} parent=43 // pred_region
          %v1904 = vld [vmem:[#allocation2] sm:$0x1]
          %v1905 = vmul.f32 %v1904, 0.00390625
          %v1906 = vld [vmem:[%s2] sm:$0xff]
          %v1907 = vld [vmem:[%s2 + $0x8] sm:$0xff]
          %v1908 = vld [vmem:[%s2 + $0x10] sm:$0xff]
          %v1909 = vld [vmem:[%s2 + $0x18] sm:$0xff]
          %v1910 = vld [vmem:[%s2 + $0x20] sm:$0xff]
          %v1911 = vld [vmem:[%s2 + $0x28] sm:$0xff]
          %v1912 = vld [vmem:[%s2 + $0x30] sm:$0xff]
          %v1913 = vld [vmem:[%s2 + $0x38] sm:$0xff]
          %v1914 = vld [vmem:[%s2 + $0x40] sm:$0xff]
          %v1915 = vld [vmem:[%s2 + $0x48] sm:$0xff]
          %v1916 = vld [vmem:[%s2 + $0x50] sm:$0xff]
          %v1917 = vld [vmem:[%s2 + $0x58] sm:$0xff]
          %v1918 = vld [vmem:[%s2 + $0x60] sm:$0xff]
          %v1919 = vld [vmem:[%s2 + $0x68] sm:$0xff]
          %v1920 = vld [vmem:[%s2 + $0x70] sm:$0xff]
          %v1921 = vld [vmem:[%s2 + $0x78] sm:$0xff]
          %v1922 = vld [vmem:[%s3] sm:$0x1]
          %1923 = vmatprep.subr.mxu0 0.0
          %1924 = vmatpush1.msra.mxu0 %v1921
          %1925 = vmatprep.subr.mxu0 0.0
          %1926 = vmatpush1.msra.mxu0 %v1920
          %1927 = vmatprep.subr.mxu0 0.0
          %1928 = vmatpush1.msra.mxu0 %v1919
          %1929 = vmatprep.subr.mxu0 0.0
          %1930 = vmatpush1.msra.mxu0 %v1918
          %1931 = vmatprep.subr.mxu0 0.0
          %1932 = vmatpush1.msra.mxu0 %v1917
          %1933 = vmatprep.subr.mxu0 0.0
          %1934 = vmatpush1.msra.mxu0 %v1916
          %1935 = vmatprep.subr.mxu0 0.0
          %1936 = vmatpush1.msra.mxu0 %v1915
          %1937 = vmatprep.subr.mxu0 0.0
          %1938 = vmatpush1.msra.mxu0 %v1914
          %1939 = vmatprep.subr.mxu0 0.0
          %1940 = vmatpush1.msra.mxu0 %v1913
          %1941 = vmatprep.subr.mxu0 0.0
          %1942 = vmatpush1.msra.mxu0 %v1912
          %1943 = vmatprep.subr.mxu0 0.0
          %1944 = vmatpush1.msra.mxu0 %v1911
          %1945 = vmatprep.subr.mxu0 0.0
          %1946 = vmatpush1.msra.mxu0 %v1910
          %1947 = vmatprep.subr.mxu0 0.0
          %1948 = vmatpush1.msra.mxu0 %v1909
          %1949 = vmatprep.subr.mxu0 0.0
          %1950 = vmatpush1.msra.mxu0 %v1908
          %1951 = vmatprep.subr.mxu0 0.0
          %1952 = vmatpush1.msra.mxu0 %v1907
          %1953 = vmatprep.subr.mxu0 0.0
          %1954 = vmatpush1.msra.mxu0 %v1906
          %1955 = vmatprep.subr.mxu0 0.0
          %1956 = vmatpush2.msra.mxu0 0.0
          %1957 = vmatprep.subr.mxu0 0.0
          %1958 = vmatpush2.msra.mxu0 0.0
          %1959 = vmatprep.subr.mxu0 0.0
          %1960 = vmatpush2.msra.mxu0 0.0
          %1961 = vmatprep.subr.mxu0 0.0
          %1962 = vmatpush2.msra.mxu0 0.0
          %1963 = vmatprep.subr.mxu0 0.0
          %1964 = vmatpush2.msra.mxu0 0.0
          %1965 = vmatprep.subr.mxu0 0.0
          %1966 = vmatpush2.msra.mxu0 0.0
          %1967 = vmatprep.subr.mxu0 0.0
          %1968 = vmatpush2.msra.mxu0 0.0
          %1969 = vmatprep.subr.mxu0 0.0
          %1970 = vmatpush2.msra.mxu0 0.0
          %1971 = vmatprep.subr.mxu0 0.0
          %1972 = vmatpush2.msra.mxu0 0.0
          %1973 = vmatprep.subr.mxu0 0.0
          %1974 = vmatpush2.msra.mxu0 0.0
          %1975 = vmatprep.subr.mxu0 0.0
          %1976 = vmatpush2.msra.mxu0 0.0
          %1977 = vmatprep.subr.mxu0 0.0
          %1978 = vmatpush2.msra.mxu0 0.0
          %1979 = vmatprep.subr.mxu0 0.0
          %1980 = vmatpush2.msra.mxu0 0.0
          %1981 = vmatprep.subr.mxu0 0.0
          %1982 = vmatpush2.msra.mxu0 0.0
          %1983 = vmatprep.subr.mxu0 0.0
          %1984 = vmatpush2.msra.mxu0 0.0
          %1985 = vmatprep.subr.mxu0 0.0
          %1986 = vmatpush2.msra.mxu0 0.0
          %1987 = vmatprep.mubr.f32.mxu0 0.0
          %1988 = vmatmul.mubr.f32.gmra.mxu0 %v1905
          %v1989 = vpop.f32.mrf.mxu0
          %v1990 = vadd.f32 %v1922, %v1989
          %v1991 = vpop.f32.mrf.mxu0
          %1992 = vdwg.mxu0
          %v1993 = vmax.f32 %v1990, 0.0
          %v1994 = vld [vmem:[%s4] sm:$0xff]
          %v1995 = vld [vmem:[%s4 + $0x8] sm:$0xff]
          %v1996 = vld [vmem:[%s4 + $0x10] sm:$0xff]
          %v1997 = vld [vmem:[%s4 + $0x18] sm:$0xff]
          %v1998 = vld [vmem:[%s4 + $0x20] sm:$0xff]
          %v1999 = vld [vmem:[%s4 + $0x28] sm:$0xff]
          %v2000 = vld [vmem:[%s4 + $0x30] sm:$0xff]
          %v2001 = vld [vmem:[%s4 + $0x38] sm:$0xff]
          %v2002 = vld [vmem:[%s4 + $0x40] sm:$0xff]
          %v2003 = vld [vmem:[%s4 + $0x48] sm:$0xff]
          %v2004 = vld [vmem:[%s4 + $0x50] sm:$0xff]
          %v2005 = vld [vmem:[%s4 + $0x58] sm:$0xff]
          %v2006 = vld [vmem:[%s4 + $0x60] sm:$0xff]
          %v2007 = vld [vmem:[%s4 + $0x68] sm:$0xff]
          %v2008 = vld [vmem:[%s4 + $0x70] sm:$0xff]
          %v2009 = vld [vmem:[%s4 + $0x78] sm:$0xff]
          %v2010 = vld [vmem:[%s5] sm:$0x1]
          %2011 = vmatprep.subr.mxu0 0.0
          %2012 = vmatpush1.msra.mxu0 %v2009
          %2013 = vmatprep.subr.mxu0 0.0
          %2014 = vmatpush1.msra.mxu0 %v2008
          %2015 = vmatprep.subr.mxu0 0.0
          %2016 = vmatpush1.msra.mxu0 %v2007
          %2017 = vmatprep.subr.mxu0 0.0
          %2018 = vmatpush1.msra.mxu0 %v2006
          %2019 = vmatprep.subr.mxu0 0.0
          %2020 = vmatpush1.msra.mxu0 %v2005
          %2021 = vmatprep.subr.mxu0 0.0
          %2022 = vmatpush1.msra.mxu0 %v2004
          %2023 = vmatprep.subr.mxu0 0.0
          %2024 = vmatpush1.msra.mxu0 %v2003
          %2025 = vmatprep.subr.mxu0 0.0
          %2026 = vmatpush1.msra.mxu0 %v2002
          %2027 = vmatprep.subr.mxu0 0.0
          %2028 = vmatpush1.msra.mxu0 %v2001
          %2029 = vmatprep.subr.mxu0 0.0
          %2030 = vmatpush1.msra.mxu0 %v2000
          %2031 = vmatprep.subr.mxu0 0.0
          %2032 = vmatpush1.msra.mxu0 %v1999
          %2033 = vmatprep.subr.mxu0 0.0
          %2034 = vmatpush1.msra.mxu0 %v1998
          %2035 = vmatprep.subr.mxu0 0.0
          %2036 = vmatpush1.msra.mxu0 %v1997
          %2037 = vmatprep.subr.mxu0 0.0
          %2038 = vmatpush1.msra.mxu0 %v1996
          %2039 = vmatprep.subr.mxu0 0.0
          %2040 = vmatpush1.msra.mxu0 %v1995
          %2041 = vmatprep.subr.mxu0 0.0
          %2042 = vmatpush1.msra.mxu0 %v1994
          %2043 = vmatprep.subr.mxu0 0.0
          %2044 = vmatpush2.msra.mxu0 0.0
          %2045 = vmatprep.subr.mxu0 0.0
          %2046 = vmatpush2.msra.mxu0 0.0
          %2047 = vmatprep.subr.mxu0 0.0
          %2048 = vmatpush2.msra.mxu0 0.0
          %2049 = vmatprep.subr.mxu0 0.0
          %2050 = vmatpush2.msra.mxu0 0.0
          %2051 = vmatprep.subr.mxu0 0.0
          %2052 = vmatpush2.msra.mxu0 0.0
          %2053 = vmatprep.subr.mxu0 0.0
          %2054 = vmatpush2.msra.mxu0 0.0
          %2055 = vmatprep.subr.mxu0 0.0
          %2056 = vmatpush2.msra.mxu0 0.0
          %2057 = vmatprep.subr.mxu0 0.0
          %2058 = vmatpush2.msra.mxu0 0.0
          %2059 = vmatprep.subr.mxu0 0.0
          %2060 = vmatpush2.msra.mxu0 0.0
          %2061 = vmatprep.subr.mxu0 0.0
          %2062 = vmatpush2.msra.mxu0 0.0
          %2063 = vmatprep.subr.mxu0 0.0
          %2064 = vmatpush2.msra.mxu0 0.0
          %2065 = vmatprep.subr.mxu0 0.0
          %2066 = vmatpush2.msra.mxu0 0.0
          %2067 = vmatprep.subr.mxu0 0.0
          %2068 = vmatpush2.msra.mxu0 0.0
          %2069 = vmatprep.subr.mxu0 0.0
          %2070 = vmatpush2.msra.mxu0 0.0
          %2071 = vmatprep.subr.mxu0 0.0
          %2072 = vmatpush2.msra.mxu0 0.0
          %2073 = vmatprep.subr.mxu0 0.0
          %2074 = vmatpush2.msra.mxu0 0.0
          %2075 = vmatprep.mubr.f32.mxu0 0.0
          %2076 = vmatmul.mubr.f32.gmra.mxu0 %v1993
          %v2077 = vpop.f32.mrf.mxu0
          %v2078 = vadd.f32 %v2010, %v2077
          %v2079 = vpop.f32.mrf.mxu0
          %2080 = vdwg.mxu0
          %vm2081 = vcmask 24576
          %2082 = vst.msk [vmem:[%s265] sm:$0x1] %vm2081, %v2078
        $region52: #{baseline_distortion_forward.1} parent=43 // pred_fallthru
          _
        %s2083 = sand.u32 %s173, 1
        %s2084 = scalar_lea.sflag [#allocation4], %s2083
        %s2085 = sand.u32 %s173, 1
        %s2086 = scalar_lea.vmem [#allocation3], %s2085
        // Predicated region
        $region53: #{baseline_distortion_forward.1} parent=43 // pred_check
          %p2087 = pneg %p183
        $region54: #{baseline_distortion_forward.1} parent=43 // pred_check_branch
          %2089 = sbr.rel (%p2087) target = $region56
        $region55: #{baseline_distortion_forward.1} parent=43 // pred_region
          %s2091 = ssub.s32 16, 16
          %2092 = vsyncadd %s2084, %s2091
          %s2093 = smul.addr %s24, 16
          %s2094 = scalar_lea.hbm %s6, %s2093
          %s2096 = sshll.u32 %s2086, 4
          %s2097 = int_to_ptr.vmem [resolvable:$true] %s2096
          %2099 = dma.vmem_to_hbm [thread:$0]  %s2097, 16, %s2094, %s2084
        $region56: #{baseline_distortion_forward.1} parent=43 // pred_fallthru
          _
      $region44: #{baseline_distortion_forward.1} parent=5 // pred_fallthru
        _
      %p2100 = scmp.le.s32.totalorder 2, %s15
      // Predicated region
      $region57: #{baseline_distortion_forward.1} parent=5 // pred_check
        %p2101 = pneg %p2100
      $region58: #{baseline_distortion_forward.1} parent=5 // pred_check_branch
        %2103 = sbr.rel (%p2101) target = $region60
      $region59: #{baseline_distortion_forward.1} parent=5 // pred_region
        %s2104 = ssub.s32 %s15, 2
        // Predicated region
        $region61: #{baseline_distortion_forward.1} parent=59 // pred_check
          %p2105 = pneg %p189
        $region62: #{baseline_distortion_forward.1} parent=59 // pred_check_branch
          %2107 = sbr.rel (%p2105) target = $region64
        $region63: #{baseline_distortion_forward.1} parent=59 // pred_region
          %s2108 = sand.u32 %s174, 1
          %s2109 = scalar_lea.sflag [#allocation4], %s2108
          %s2110 = sand.u32 %s174, 1
          %s2111 = scalar_lea.vmem [#allocation3], %s2110
          %2112 = dma.done %s2109, 16
        $region64: #{baseline_distortion_forward.1} parent=59 // pred_fallthru
          _
      $region60: #{baseline_distortion_forward.1} parent=5 // pred_fallthru
        _
    $region6: #{baseline_distortion_forward.1} parent=1 // loop_footer
      %s19 = sadd.s32 1, %s15
    $region7: #{baseline_distortion_forward.1} parent=1 // loop_footer_branch
      %14 = sbr.rel target = $region3
    $region8: #{baseline_distortion_forward.1} parent=1 // loop_exit
      _
    %2113 = vsyncpa [#allocation4], 1
    %s2114 = scalar_lea.sflag [#allocation4], 1
    %2115 = vsyncpa %s2114, 1

</llo_original>
